<compile_context>
chip_gen: v7x
topology: tpu7x:2x2x1
jax: 0.10.0
libtpu: 0.0.40
codegen_flags: <defaults>
</compile_context>

<pallas_src>
import math
import functools
import jax
import jax.numpy as jnp
import numpy as np
from jax.experimental import pallas as pl
from jax.experimental.pallas import tpu as pltpu

NHEAD = 4
LN_EPS = 1e-5
NEG_INF = -1e30  # large negative instead of -inf; exp underflows to exactly 0


def _encoder_kernel(x_ref,                # (B_blk, S, D)
                    mask_ref,             # (B_blk, S, S) additive causal+padding bias
                    wqkv_ref, bqkv_ref,   # (D, 3D), (1, 3D)
                    wout_ref, bout_ref,   # (D, D),  (1, D)
                    g1_ref, be1_ref,      # (1, D),  (1, D)   norm1
                    w1_ref, b1_ref,       # (D, F),  (1, F)   linear1
                    w2_ref, b2_ref,       # (F, D),  (1, D)   linear2
                    g2_ref, be2_ref,      # (1, D),  (1, D)   norm2
                    out_ref,              # (B_blk, S, D)
                    attn_ref=None):       # (B_blk, S, S) (only when need_weights)
    Bb, S, D = x_ref.shape
    H = NHEAD
    hd = D // H
    R = Bb * S
    scale = 1.0 / math.sqrt(hd)

    x2d = x_ref[...].reshape(R, D)        # all rows of the block as one 2-D slab

    # --- fused QKV projection: one (R, D) @ (D, 3D) MXU matmul for the whole block ---
    qkv = jnp.dot(x2d, wqkv_ref[...], preferred_element_type=jnp.float32) + bqkv_ref[...]

    # --- split heads into a leading batch dim: (H*Bb, S, hd); no per-head matmul loop ---
    def heads(base):
        cols = [qkv[:, base + h * hd: base + (h + 1) * hd] for h in range(H)]  # (R, hd)
        return jnp.stack(cols, axis=0).reshape(H * Bb, S, hd)

    qh = heads(0)
    kh = heads(D)
    vh = heads(2 * D)

    # --- batched scaled-dot-product attention over all heads & batch rows at once ---
    scores = jnp.einsum('bqd,bkd->bqk', qh, kh,
                        preferred_element_type=jnp.float32) * scale          # (H*Bb, S, S)
    scores = scores.reshape(H, Bb, S, S) + mask_ref[...][None]               # + mask bias
    m = jnp.max(scores, axis=-1, keepdims=True)
    e = jnp.exp(scores - m)
    p = e * pl.reciprocal(jnp.sum(e, axis=-1, keepdims=True), approx=True)   # (H, Bb, S, S)

    if attn_ref is not None:
        attn_ref[...] = jnp.mean(p, axis=0)                                  # head-averaged

    ctx = jnp.einsum('bqk,bkd->bqd', p.reshape(H * Bb, S, S), vh,
                     preferred_element_type=jnp.float32)                     # (H*Bb, S, hd)
    ctxh = ctx.reshape(H, R, hd)
    ctx2d = jnp.concatenate([ctxh[h] for h in range(H)], axis=-1)            # (R, D)

    # --- output projection + residual + LayerNorm1 ---
    src = x2d + jnp.dot(ctx2d, wout_ref[...],
                        preferred_element_type=jnp.float32) + bout_ref[...]
    mu = jnp.mean(src, axis=-1, keepdims=True)
    var = jnp.mean((src - mu) ** 2, axis=-1, keepdims=True)
    src = (src - mu) * jax.lax.rsqrt(var + LN_EPS) * g1_ref[...] + be1_ref[...]

    # --- feedforward (ReLU) + residual + LayerNorm2 ---
    h1 = jnp.maximum(
        jnp.dot(src, w1_ref[...], preferred_element_type=jnp.float32) + b1_ref[...], 0.0)
    src2 = src + jnp.dot(h1, w2_ref[...], preferred_element_type=jnp.float32) + b2_ref[...]
    mu2 = jnp.mean(src2, axis=-1, keepdims=True)
    var2 = jnp.mean((src2 - mu2) ** 2, axis=-1, keepdims=True)
    y = (src2 - mu2) * jax.lax.rsqrt(var2 + LN_EPS) * g2_ref[...] + be2_ref[...]
    out_ref[...] = y.reshape(Bb, S, D)


def _choose_b_blk(B, S):
    # Aim for >= ~128 rows (B_blk * S) per grid step so the row-wise matmuls fill the MXU
    # M dimension and the ~0.35 us/step grid overhead is amortized.  Blocks at these model
    # sizes are a few KiB, far below even v7x's 64 MiB VMEM (re-derive if S/D scale up).
    target = pl.cdiv(128, S)
    return max(1, min(B, target))


def self_attention_for_rl(x, train_len, params, need_weights=True):
    """x: (B, S, D) f32, train_len: (B,) or (B,1) int.

    Returns (out, attn_avg) if need_weights else out.
    """
    B, S, D = x.shape
    F = params["linear1_weight"].shape[0]
    train_len = jnp.asarray(train_len).reshape(-1).astype(jnp.int32)

    # combined causal + key-padding additive mask, built once in plain XLA
    row = jnp.arange(S)[:, None]
    col = jnp.arange(S)[None, :]
    causal = col <= row                                     # (S, S)
    valid = jnp.arange(S)[None, :] < train_len[:, None]     # (B, S)
    keep = causal[None, :, :] & valid[:, None, :]           # (B, S, S)
    mask = jnp.where(keep, 0.0, NEG_INF).astype(jnp.float32)

    b_blk = _choose_b_blk(B, S)
    n_blk = pl.cdiv(B, b_blk)
    b_pad = n_blk * b_blk
    if b_pad != B:
        x = jnp.pad(x, ((0, b_pad - B), (0, 0), (0, 0)))
        mask = jnp.pad(mask, ((0, b_pad - B), (0, 0), (0, 0)), constant_values=NEG_INF)

    # glue: pre-transpose weights, reshape 1-D params to (1, N) rows for VMEM
    wqkv_t = params["in_proj_weight"].T                     # (D, 3D)
    bqkv = params["in_proj_bias"].reshape(1, 3 * D)
    wout_t = params["out_proj_weight"].T                    # (D, D)
    bout = params["out_proj_bias"].reshape(1, D)
    g1 = params["norm1_weight"].reshape(1, D)
    be1 = params["norm1_bias"].reshape(1, D)
    w1_t = params["linear1_weight"].T                       # (D, F)
    b1 = params["linear1_bias"].reshape(1, F)
    w2_t = params["linear2_weight"].T                       # (F, D)
    b2 = params["linear2_bias"].reshape(1, D)
    g2 = params["norm2_weight"].reshape(1, D)
    be2 = params["norm2_bias"].reshape(1, D)

    full2d = lambda shape: pl.BlockSpec(shape, lambda i: (0, 0))
    in_specs = [
        pl.BlockSpec((b_blk, S, D), lambda i: (i, 0, 0)),   # x block
        pl.BlockSpec((b_blk, S, S), lambda i: (i, 0, 0)),   # mask block
        full2d((D, 3 * D)), full2d((1, 3 * D)),             # qkv proj
        full2d((D, D)), full2d((1, D)),                     # out proj
        full2d((1, D)), full2d((1, D)),                     # norm1
        full2d((D, F)), full2d((1, F)),                     # linear1
        full2d((F, D)), full2d((1, D)),                     # linear2
        full2d((1, D)), full2d((1, D)),                     # norm2
    ]
    out_spec_y = pl.BlockSpec((b_blk, S, D), lambda i: (i, 0, 0))
    if need_weights:
        out_specs = (out_spec_y, pl.BlockSpec((b_blk, S, S), lambda i: (i, 0, 0)))
        out_shape = (jax.ShapeDtypeStruct((b_pad, S, D), jnp.float32),
                     jax.ShapeDtypeStruct((b_pad, S, S), jnp.float32))
    else:
        out_specs = out_spec_y
        out_shape = jax.ShapeDtypeStruct((b_pad, S, D), jnp.float32)

    grid_spec = pltpu.PrefetchScalarGridSpec(
        num_scalar_prefetch=0,
        grid=(n_blk,),
        in_specs=in_specs,
        out_specs=out_specs,
    )
    results = pl.pallas_call(
        _encoder_kernel,
        out_shape=out_shape,
        grid_spec=grid_spec,
        compiler_params=pltpu.CompilerParams(
            dimension_semantics=("parallel",)),   # batch blocks are independent (v7x 2 TCs)
    )(x, mask, wqkv_t, bqkv, wout_t, bout, g1, be1, w1_t, b1, w2_t, b2, g2, be2)

    if need_weights:
        out, attn = results
        return out[:B], attn[:B]
    return results[:B]


# ---------------- pure-JAX reference (for correctness check) ----------------
def _layer_norm(x, w, b):
    mu = jnp.mean(x, axis=-1, keepdims=True)
    var = jnp.mean((x - mu) ** 2, axis=-1, keepdims=True)
    return (x - mu) * jax.lax.rsqrt(var + LN_EPS) * w + b


def reference(x, train_len, p):
    B, S, D = x.shape
    H, hd = NHEAD, D // NHEAD
    train_len = jnp.asarray(train_len).reshape(-1).astype(jnp.int32)
    qkv = x @ p["in_proj_weight"].T + p["in_proj_bias"]
    q, k, v = jnp.split(qkv, 3, axis=-1)
    sh = lambda t: t.reshape(B, S, H, hd).transpose(0, 2, 1, 3)
    q, k, v = sh(q), sh(k), sh(v)
    scores = jnp.einsum("bhqd,bhkd->bhqk", q, k) / math.sqrt(hd)
    row = jnp.arange(S)[:, None]
    col = jnp.arange(S)[None, :]
    causal = col <= row                                    # (S, S)
    valid = jnp.arange(S)[None, :] < train_len[:, None]    # (B, S)
    keep = causal[None, None, :, :] & valid[:, None, None, :]   # (B, 1, S, S)
    scores = jnp.where(keep, scores, NEG_INF)
    pa = jax.nn.softmax(scores, axis=-1)
    ctx = jnp.einsum("bhqk,bhkd->bhqd", pa, v).transpose(0, 2, 1, 3).reshape(B, S, D)
    attn_avg = pa.mean(axis=1)
    src = x + (ctx @ p["out_proj_weight"].T + p["out_proj_bias"])
    src = _layer_norm(src, p["norm1_weight"], p["norm1_bias"])
    ff = (jax.nn.relu(src @ p["linear1_weight"].T + p["linear1_bias"])
          @ p["linear2_weight"].T + p["linear2_bias"])
    src = _layer_norm(src + ff, p["norm2_weight"], p["norm2_bias"])
    return src, attn_avg


def init_params(key, d_model, dim_feedforward):
    ks = jax.random.split(key, 8)
    s = 0.1
    return {
        "in_proj_weight": s * jax.random.normal(ks[0], (3 * d_model, d_model), jnp.float32),
        "in_proj_bias": s * jax.random.normal(ks[1], (3 * d_model,), jnp.float32),
        "out_proj_weight": s * jax.random.normal(ks[2], (d_model, d_model), jnp.float32),
        "out_proj_bias": s * jax.random.normal(ks[3], (d_model,), jnp.float32),
        "linear1_weight": s * jax.random.normal(ks[4], (dim_feedforward, d_model), jnp.float32),
        "linear1_bias": s * jax.random.normal(ks[5], (dim_feedforward,), jnp.float32),
        "linear2_weight": s * jax.random.normal(ks[6], (d_model, dim_feedforward), jnp.float32),
        "linear2_bias": s * jax.random.normal(ks[7], (d_model,), jnp.float32),
        "norm1_weight": jnp.ones((d_model,), jnp.float32),
        "norm1_bias": jnp.zeros((d_model,), jnp.float32),
        "norm2_weight": jnp.ones((d_model,), jnp.float32),
        "norm2_bias": jnp.zeros((d_model,), jnp.float32),
    }


if __name__ == "__main__":
    # SelfAttentionForRL(observation_size=12, action_size=4) -> d_model = 16, nhead = 4
    observation_size, action_size = 12, 4
    d_model = observation_size + action_size
    dim_feedforward = 32
    B, S = 2, 8

    key = jax.random.PRNGKey(0)
    kx, kp = jax.random.split(key)
    x = jax.random.normal(kx, (B, S, d_model), jnp.float32)      # (N, seq, obs+act)
    train_len = jnp.array([[8], [5]], dtype=jnp.int32)           # (B, 1) like the module
    params = init_params(kp, d_model, dim_feedforward)

    out, attn = self_attention_for_rl(x, train_len, params, need_weights=True)
    out = jax.block_until_ready(out)
    attn = jax.block_until_ready(attn)

    # need_weights=False fast path (drops the (B,S,S) writeback entirely)
    out_only = jax.block_until_ready(
        self_attention_for_rl(x, train_len, params, need_weights=False))

    ref_out, ref_attn = reference(x, train_len, params)
    # tolerance accommodates pl.reciprocal(approx=True) in the softmax denominator
    np.testing.assert_allclose(np.asarray(out), np.asarray(ref_out), rtol=2e-3, atol=2e-3)
    np.testing.assert_allclose(np.asarray(attn), np.asarray(ref_attn), rtol=2e-3, atol=2e-3)
    np.testing.assert_allclose(np.asarray(out_only), np.asarray(out), rtol=1e-6, atol=1e-6)

    # TODO(synk): dropout layers (p=0.2) are treated as identity (inference mode).
    print("KERNEL_OK")
</pallas_src>

<mosaic_0001>
module attributes {stable_mosaic.version = 11 : i64} {
  func.func @_encoder_kernel(%arg0: i32, %arg1: memref<2x8x16xf32, #tpu.memory_space<vmem>>, %arg2: memref<2x8x8xf32, #tpu.memory_space<vmem>>, %arg3: memref<16x48xf32, #tpu.memory_space<vmem>>, %arg4: memref<1x48xf32, #tpu.memory_space<vmem>>, %arg5: memref<16x16xf32, #tpu.memory_space<vmem>>, %arg6: memref<1x16xf32, #tpu.memory_space<vmem>>, %arg7: memref<1x16xf32, #tpu.memory_space<vmem>>, %arg8: memref<1x16xf32, #tpu.memory_space<vmem>>, %arg9: memref<16x32xf32, #tpu.memory_space<vmem>>, %arg10: memref<1x32xf32, #tpu.memory_space<vmem>>, %arg11: memref<32x16xf32, #tpu.memory_space<vmem>>, %arg12: memref<1x16xf32, #tpu.memory_space<vmem>>, %arg13: memref<1x16xf32, #tpu.memory_space<vmem>>, %arg14: memref<1x16xf32, #tpu.memory_space<vmem>>, %arg15: memref<2x8x16xf32, #tpu.memory_space<vmem>>, %arg16: memref<2x8x8xf32, #tpu.memory_space<vmem>>) attributes {dimension_semantics = [#tpu.dimension_semantics<parallel>], iteration_bounds = array<i64: 1>, scalar_prefetch = 0 : i64, scratch_operands = 0 : i64, tpu.core_type = #tpu.core_type<tc>, window_params = [{transform_indices = @transform_0, window_bounds = array<i64: 2, 8, 16>}, {transform_indices = @transform_1, window_bounds = array<i64: 2, 8, 8>}, {pipeline_mode = #tpu.pipeline_mode<synchronous>, transform_indices = @transform_2, window_bounds = array<i64: 16, 48>}, {pipeline_mode = #tpu.pipeline_mode<synchronous>, transform_indices = @transform_3, window_bounds = array<i64: 1, 48>}, {pipeline_mode = #tpu.pipeline_mode<synchronous>, transform_indices = @transform_4, window_bounds = array<i64: 16, 16>}, {pipeline_mode = #tpu.pipeline_mode<synchronous>, transform_indices = @transform_5, window_bounds = array<i64: 1, 16>}, {pipeline_mode = #tpu.pipeline_mode<synchronous>, transform_indices = @transform_6, window_bounds = array<i64: 1, 16>}, {pipeline_mode = #tpu.pipeline_mode<synchronous>, transform_indices = @transform_7, window_bounds = array<i64: 1, 16>}, {pipeline_mode = #tpu.pipeline_mode<synchronous>, transform_indices = @transform_8, window_bounds = array<i64: 16, 32>}, {pipeline_mode = #tpu.pipeline_mode<synchronous>, transform_indices = @transform_9, window_bounds = array<i64: 1, 32>}, {pipeline_mode = #tpu.pipeline_mode<synchronous>, transform_indices = @transform_10, window_bounds = array<i64: 32, 16>}, {pipeline_mode = #tpu.pipeline_mode<synchronous>, transform_indices = @transform_11, window_bounds = array<i64: 1, 16>}, {pipeline_mode = #tpu.pipeline_mode<synchronous>, transform_indices = @transform_12, window_bounds = array<i64: 1, 16>}, {pipeline_mode = #tpu.pipeline_mode<synchronous>, transform_indices = @transform_13, window_bounds = array<i64: 1, 16>}, {transform_indices = @transform_14, window_bounds = array<i64: 2, 8, 16>}, {transform_indices = @transform_15, window_bounds = array<i64: 2, 8, 8>}]} {
    %c0 = arith.constant 0 : index
    %c0_0 = arith.constant 0 : index
    %c0_1 = arith.constant 0 : index
    %0 = vector.load %arg1[%c0, %c0_0, %c0_1] : memref<2x8x16xf32, #tpu.memory_space<vmem>>, vector<2x8x16xf32>
    %1 = vector.shape_cast %0 : vector<2x8x16xf32> to vector<16x16xf32>
    %c0_2 = arith.constant 0 : index
    %c0_3 = arith.constant 0 : index
    %2 = vector.load %arg3[%c0_2, %c0_3] : memref<16x48xf32, #tpu.memory_space<vmem>>, vector<16x48xf32>
    %cst = arith.constant dense<0.000000e+00> : vector<16x48xf32>
    %3 = tpu.matmul %1, %2, %cst {dimension_numbers = #tpu.dot_dimension_numbers<[1], [0], [0], [1], [0, 0, 1, 1], [], []>} : vector<16x16xf32>, vector<16x48xf32>, vector<16x48xf32> -> vector<16x48xf32>
    %c0_4 = arith.constant 0 : index
    %c0_5 = arith.constant 0 : index
    %4 = vector.load %arg4[%c0_4, %c0_5] : memref<1x48xf32, #tpu.memory_space<vmem>>, vector<1x48xf32>
    %5 = vector.broadcast %4 : vector<1x48xf32> to vector<16x48xf32>
    %6 = arith.addf %3, %5 : vector<16x48xf32>
    %7 = vector.extract_strided_slice %6 {offsets = [0, 0], sizes = [16, 4], strides = [1, 1]} : vector<16x48xf32> to vector<16x4xf32>
    %8 = vector.extract_strided_slice %6 {offsets = [0, 4], sizes = [16, 4], strides = [1, 1]} : vector<16x48xf32> to vector<16x4xf32>
    %9 = vector.extract_strided_slice %6 {offsets = [0, 8], sizes = [16, 4], strides = [1, 1]} : vector<16x48xf32> to vector<16x4xf32>
    %10 = vector.extract_strided_slice %6 {offsets = [0, 12], sizes = [16, 4], strides = [1, 1]} : vector<16x48xf32> to vector<16x4xf32>
    %11 = vector.shape_cast %7 : vector<16x4xf32> to vector<1x16x4xf32>
    %12 = vector.shape_cast %8 : vector<16x4xf32> to vector<1x16x4xf32>
    %13 = vector.shape_cast %9 : vector<16x4xf32> to vector<1x16x4xf32>
    %14 = vector.shape_cast %10 : vector<16x4xf32> to vector<1x16x4xf32>
    %15 = tpu.concatenate %11, %12, %13, %14 in 0 : vector<1x16x4xf32>, vector<1x16x4xf32>, vector<1x16x4xf32>, vector<1x16x4xf32> -> vector<4x16x4xf32>
    %16 = vector.shape_cast %15 : vector<4x16x4xf32> to vector<8x8x4xf32>
    %17 = vector.extract_strided_slice %6 {offsets = [0, 16], sizes = [16, 4], strides = [1, 1]} : vector<16x48xf32> to vector<16x4xf32>
    %18 = vector.extract_strided_slice %6 {offsets = [0, 20], sizes = [16, 4], strides = [1, 1]} : vector<16x48xf32> to vector<16x4xf32>
    %19 = vector.extract_strided_slice %6 {offsets = [0, 24], sizes = [16, 4], strides = [1, 1]} : vector<16x48xf32> to vector<16x4xf32>
    %20 = vector.extract_strided_slice %6 {offsets = [0, 28], sizes = [16, 4], strides = [1, 1]} : vector<16x48xf32> to vector<16x4xf32>
    %21 = vector.shape_cast %17 : vector<16x4xf32> to vector<1x16x4xf32>
    %22 = vector.shape_cast %18 : vector<16x4xf32> to vector<1x16x4xf32>
    %23 = vector.shape_cast %19 : vector<16x4xf32> to vector<1x16x4xf32>
    %24 = vector.shape_cast %20 : vector<16x4xf32> to vector<1x16x4xf32>
    %25 = tpu.concatenate %21, %22, %23, %24 in 0 : vector<1x16x4xf32>, vector<1x16x4xf32>, vector<1x16x4xf32>, vector<1x16x4xf32> -> vector<4x16x4xf32>
    %26 = vector.shape_cast %25 : vector<4x16x4xf32> to vector<8x8x4xf32>
    %27 = vector.extract_strided_slice %6 {offsets = [0, 32], sizes = [16, 4], strides = [1, 1]} : vector<16x48xf32> to vector<16x4xf32>
    %28 = vector.extract_strided_slice %6 {offsets = [0, 36], sizes = [16, 4], strides = [1, 1]} : vector<16x48xf32> to vector<16x4xf32>
    %29 = vector.extract_strided_slice %6 {offsets = [0, 40], sizes = [16, 4], strides = [1, 1]} : vector<16x48xf32> to vector<16x4xf32>
    %30 = vector.extract_strided_slice %6 {offsets = [0, 44], sizes = [16, 4], strides = [1, 1]} : vector<16x48xf32> to vector<16x4xf32>
    %31 = vector.shape_cast %27 : vector<16x4xf32> to vector<1x16x4xf32>
    %32 = vector.shape_cast %28 : vector<16x4xf32> to vector<1x16x4xf32>
    %33 = vector.shape_cast %29 : vector<16x4xf32> to vector<1x16x4xf32>
    %34 = vector.shape_cast %30 : vector<16x4xf32> to vector<1x16x4xf32>
    %35 = tpu.concatenate %31, %32, %33, %34 in 0 : vector<1x16x4xf32>, vector<1x16x4xf32>, vector<1x16x4xf32>, vector<1x16x4xf32> -> vector<4x16x4xf32>
    %36 = vector.shape_cast %35 : vector<4x16x4xf32> to vector<8x8x4xf32>
    "tpu.trace_start"() <{level = 10 : i32, message = "bqd,bkd->bqk"}> : () -> ()
    %cst_6 = arith.constant dense<0.000000e+00> : vector<8x8x8xf32>
    %37 = tpu.matmul %16, %26, %cst_6 {dimension_numbers = #tpu.dot_dimension_numbers<[2], [2], [1], [1], [0, 0, 0, 1, 1, 1], [0], [0]>} : vector<8x8x4xf32>, vector<8x8x4xf32>, vector<8x8x8xf32> -> vector<8x8x8xf32>
    "tpu.trace_stop"() : () -> ()
    %cst_7 = arith.constant 5.000000e-01 : f32
    %38 = vector.broadcast %cst_7 : f32 to vector<8x8x8xf32>
    %39 = arith.mulf %37, %38 : vector<8x8x8xf32>
    %40 = vector.shape_cast %39 : vector<8x8x8xf32> to vector<4x2x8x8xf32>
    %c0_8 = arith.constant 0 : index
    %c0_9 = arith.constant 0 : index
    %c0_10 = arith.constant 0 : index
    %41 = vector.load %arg2[%c0_8, %c0_9, %c0_10] : memref<2x8x8xf32, #tpu.memory_space<vmem>>, vector<2x8x8xf32>
    %42 = vector.shape_cast %41 : vector<2x8x8xf32> to vector<1x2x8x8xf32>
    %43 = vector.broadcast %42 : vector<1x2x8x8xf32> to vector<4x2x8x8xf32>
    %44 = arith.addf %40, %43 : vector<4x2x8x8xf32>
    %cst_11 = arith.constant dense<0xFF800000> : vector<4x2x8xf32>
    %45 = vector.multi_reduction <maximumf>, %44, %cst_11 [3] : vector<4x2x8x8xf32> to vector<4x2x8xf32>
    %46 = vector.shape_cast %45 : vector<4x2x8xf32> to vector<4x2x8x1xf32>
    %47 = vector.broadcast %46 : vector<4x2x8x1xf32> to vector<4x2x8x8xf32>
    %48 = arith.subf %44, %47 : vector<4x2x8x8xf32>
    %49 = math.exp %48 : vector<4x2x8x8xf32>
    %cst_12 = arith.constant dense<0.000000e+00> : vector<4x2x8xf32>
    %50 = vector.multi_reduction <add>, %49, %cst_12 [3] : vector<4x2x8x8xf32> to vector<4x2x8xf32>
    %51 = vector.shape_cast %50 : vector<4x2x8xf32> to vector<4x2x8x1xf32>
    %52 = tpu.reciprocal %51 {approx = true} : vector<4x2x8x1xf32> -> vector<4x2x8x1xf32>
    %53 = vector.broadcast %52 : vector<4x2x8x1xf32> to vector<4x2x8x8xf32>
    %54 = arith.mulf %49, %53 : vector<4x2x8x8xf32>
    %cst_13 = arith.constant dense<0.000000e+00> : vector<2x8x8xf32>
    %55 = vector.multi_reduction <add>, %54, %cst_13 [0] : vector<4x2x8x8xf32> to vector<2x8x8xf32>
    %cst_14 = arith.constant 4.000000e+00 : f32
    %56 = vector.broadcast %cst_14 : f32 to vector<2x8x8xf32>
    %57 = arith.divf %55, %56 : vector<2x8x8xf32>
    %c0_15 = arith.constant 0 : index
    %c0_16 = arith.constant 0 : index
    %c0_17 = arith.constant 0 : index
    %58 = vector.load %arg16[%c0_15, %c0_16, %c0_17] : memref<2x8x8xf32, #tpu.memory_space<vmem>>, vector<2x8x8xf32>
    tpu.vector_store %arg16[%c0_15, %c0_16, %c0_17], %57 {strides = array<i32>} : memref<2x8x8xf32, #tpu.memory_space<vmem>>, vector<2x8x8xf32>,
    %59 = vector.shape_cast %54 : vector<4x2x8x8xf32> to vector<8x8x8xf32>
    "tpu.trace_start"() <{level = 10 : i32, message = "bqk,bkd->bqd"}> : () -> ()
    %cst_18 = arith.constant dense<0.000000e+00> : vector<8x8x4xf32>
    %60 = tpu.matmul %59, %36, %cst_18 {dimension_numbers = #tpu.dot_dimension_numbers<[2], [1], [1], [2], [0, 0, 0, 1, 1, 2], [0], [0]>} : vector<8x8x8xf32>, vector<8x8x4xf32>, vector<8x8x4xf32> -> vector<8x8x4xf32>
    "tpu.trace_stop"() : () -> ()
    %61 = vector.shape_cast %60 : vector<8x8x4xf32> to vector<4x16x4xf32>
    %62 = vector.extract_strided_slice %61 {offsets = [0, 0, 0], sizes = [1, 16, 4], strides = [1, 1, 1]} : vector<4x16x4xf32> to vector<1x16x4xf32>
    %63 = vector.shape_cast %62 : vector<1x16x4xf32> to vector<16x4xf32>
    %64 = vector.extract_strided_slice %61 {offsets = [1, 0, 0], sizes = [1, 16, 4], strides = [1, 1, 1]} : vector<4x16x4xf32> to vector<1x16x4xf32>
    %65 = vector.shape_cast %64 : vector<1x16x4xf32> to vector<16x4xf32>
    %66 = vector.extract_strided_slice %61 {offsets = [2, 0, 0], sizes = [1, 16, 4], strides = [1, 1, 1]} : vector<4x16x4xf32> to vector<1x16x4xf32>
    %67 = vector.shape_cast %66 : vector<1x16x4xf32> to vector<16x4xf32>
    %68 = vector.extract_strided_slice %61 {offsets = [3, 0, 0], sizes = [1, 16, 4], strides = [1, 1, 1]} : vector<4x16x4xf32> to vector<1x16x4xf32>
    %69 = vector.shape_cast %68 : vector<1x16x4xf32> to vector<16x4xf32>
    %70 = tpu.concatenate %63, %65, %67, %69 in 1 : vector<16x4xf32>, vector<16x4xf32>, vector<16x4xf32>, vector<16x4xf32> -> vector<16x16xf32>
    %c0_19 = arith.constant 0 : index
    %c0_20 = arith.constant 0 : index
    %71 = vector.load %arg5[%c0_19, %c0_20] : memref<16x16xf32, #tpu.memory_space<vmem>>, vector<16x16xf32>
    %cst_21 = arith.constant dense<0.000000e+00> : vector<16x16xf32>
    %72 = tpu.matmul %70, %71, %cst_21 {dimension_numbers = #tpu.dot_dimension_numbers<[1], [0], [0], [1], [0, 0, 1, 1], [], []>} : vector<16x16xf32>, vector<16x16xf32>, vector<16x16xf32> -> vector<16x16xf32>
    %73 = arith.addf %1, %72 : vector<16x16xf32>
    %c0_22 = arith.constant 0 : index
    %c0_23 = arith.constant 0 : index
    %74 = vector.load %arg6[%c0_22, %c0_23] : memref<1x16xf32, #tpu.memory_space<vmem>>, vector<1x16xf32>
    %75 = vector.broadcast %74 : vector<1x16xf32> to vector<16x16xf32>
    %76 = arith.addf %73, %75 : vector<16x16xf32>
    %cst_24 = arith.constant dense<0.000000e+00> : vector<16xf32>
    %77 = vector.multi_reduction <add>, %76, %cst_24 [1] : vector<16x16xf32> to vector<16xf32>
    %78 = vector.shape_cast %77 : vector<16xf32> to vector<16x1xf32>
    %cst_25 = arith.constant 1.600000e+01 : f32
    %79 = vector.broadcast %cst_25 : f32 to vector<16x1xf32>
    %80 = arith.divf %78, %79 : vector<16x1xf32>
    %81 = vector.broadcast %80 : vector<16x1xf32> to vector<16x16xf32>
    %82 = arith.subf %76, %81 : vector<16x16xf32>
    %83 = arith.mulf %82, %82 : vector<16x16xf32>
    %cst_26 = arith.constant dense<0.000000e+00> : vector<16xf32>
    %84 = vector.multi_reduction <add>, %83, %cst_26 [1] : vector<16x16xf32> to vector<16xf32>
    %85 = vector.shape_cast %84 : vector<16xf32> to vector<16x1xf32>
    %cst_27 = arith.constant 1.600000e+01 : f32
    %86 = vector.broadcast %cst_27 : f32 to vector<16x1xf32>
    %87 = arith.divf %85, %86 : vector<16x1xf32>
    %88 = vector.broadcast %80 : vector<16x1xf32> to vector<16x16xf32>
    %89 = arith.subf %76, %88 : vector<16x16xf32>
    %cst_28 = arith.constant 9.99999974E-6 : f32
    %90 = vector.broadcast %cst_28 : f32 to vector<16x1xf32>
    %91 = arith.addf %87, %90 : vector<16x1xf32>
    %92 = math.rsqrt %91 : vector<16x1xf32>
    %93 = vector.broadcast %92 : vector<16x1xf32> to vector<16x16xf32>
    %94 = arith.mulf %89, %93 : vector<16x16xf32>
    %c0_29 = arith.constant 0 : index
    %c0_30 = arith.constant 0 : index
    %95 = vector.load %arg7[%c0_29, %c0_30] : memref<1x16xf32, #tpu.memory_space<vmem>>, vector<1x16xf32>
    %96 = vector.broadcast %95 : vector<1x16xf32> to vector<16x16xf32>
    %97 = arith.mulf %94, %96 : vector<16x16xf32>
    %c0_31 = arith.constant 0 : index
    %c0_32 = arith.constant 0 : index
    %98 = vector.load %arg8[%c0_31, %c0_32] : memref<1x16xf32, #tpu.memory_space<vmem>>, vector<1x16xf32>
    %99 = vector.broadcast %98 : vector<1x16xf32> to vector<16x16xf32>
    %100 = arith.addf %97, %99 : vector<16x16xf32>
    %c0_33 = arith.constant 0 : index
    %c0_34 = arith.constant 0 : index
    %101 = vector.load %arg9[%c0_33, %c0_34] : memref<16x32xf32, #tpu.memory_space<vmem>>, vector<16x32xf32>
    %cst_35 = arith.constant dense<0.000000e+00> : vector<16x32xf32>
    %102 = tpu.matmul %100, %101, %cst_35 {dimension_numbers = #tpu.dot_dimension_numbers<[1], [0], [0], [1], [0, 0, 1, 1], [], []>} : vector<16x16xf32>, vector<16x32xf32>, vector<16x32xf32> -> vector<16x32xf32>
    %c0_36 = arith.constant 0 : index
    %c0_37 = arith.constant 0 : index
    %103 = vector.load %arg10[%c0_36, %c0_37] : memref<1x32xf32, #tpu.memory_space<vmem>>, vector<1x32xf32>
    %104 = vector.broadcast %103 : vector<1x32xf32> to vector<16x32xf32>
    %105 = arith.addf %102, %104 : vector<16x32xf32>
    %cst_38 = arith.constant 0.000000e+00 : f32
    %106 = vector.broadcast %cst_38 : f32 to vector<16x32xf32>
    %107 = arith.maximumf %105, %106 : vector<16x32xf32>
    %c0_39 = arith.constant 0 : index
    %c0_40 = arith.constant 0 : index
    %108 = vector.load %arg11[%c0_39, %c0_40] : memref<32x16xf32, #tpu.memory_space<vmem>>, vector<32x16xf32>
    %cst_41 = arith.constant dense<0.000000e+00> : vector<16x16xf32>
    %109 = tpu.matmul %107, %108, %cst_41 {dimension_numbers = #tpu.dot_dimension_numbers<[1], [0], [0], [1], [0, 0, 1, 1], [], []>} : vector<16x32xf32>, vector<32x16xf32>, vector<16x16xf32> -> vector<16x16xf32>
    %110 = arith.addf %100, %109 : vector<16x16xf32>
    %c0_42 = arith.constant 0 : index
    %c0_43 = arith.constant 0 : index
    %111 = vector.load %arg12[%c0_42, %c0_43] : memref<1x16xf32, #tpu.memory_space<vmem>>, vector<1x16xf32>
    %112 = vector.broadcast %111 : vector<1x16xf32> to vector<16x16xf32>
    %113 = arith.addf %110, %112 : vector<16x16xf32>
    %cst_44 = arith.constant dense<0.000000e+00> : vector<16xf32>
    %114 = vector.multi_reduction <add>, %113, %cst_44 [1] : vector<16x16xf32> to vector<16xf32>
    %115 = vector.shape_cast %114 : vector<16xf32> to vector<16x1xf32>
    %cst_45 = arith.constant 1.600000e+01 : f32
    %116 = vector.broadcast %cst_45 : f32 to vector<16x1xf32>
    %117 = arith.divf %115, %116 : vector<16x1xf32>
    %118 = vector.broadcast %117 : vector<16x1xf32> to vector<16x16xf32>
    %119 = arith.subf %113, %118 : vector<16x16xf32>
    %120 = arith.mulf %119, %119 : vector<16x16xf32>
    %cst_46 = arith.constant dense<0.000000e+00> : vector<16xf32>
    %121 = vector.multi_reduction <add>, %120, %cst_46 [1] : vector<16x16xf32> to vector<16xf32>
    %122 = vector.shape_cast %121 : vector<16xf32> to vector<16x1xf32>
    %cst_47 = arith.constant 1.600000e+01 : f32
    %123 = vector.broadcast %cst_47 : f32 to vector<16x1xf32>
    %124 = arith.divf %122, %123 : vector<16x1xf32>
    %125 = vector.broadcast %117 : vector<16x1xf32> to vector<16x16xf32>
    %126 = arith.subf %113, %125 : vector<16x16xf32>
    %cst_48 = arith.constant 9.99999974E-6 : f32
    %127 = vector.broadcast %cst_48 : f32 to vector<16x1xf32>
    %128 = arith.addf %124, %127 : vector<16x1xf32>
    %129 = math.rsqrt %128 : vector<16x1xf32>
    %130 = vector.broadcast %129 : vector<16x1xf32> to vector<16x16xf32>
    %131 = arith.mulf %126, %130 : vector<16x16xf32>
    %c0_49 = arith.constant 0 : index
    %c0_50 = arith.constant 0 : index
    %132 = vector.load %arg13[%c0_49, %c0_50] : memref<1x16xf32, #tpu.memory_space<vmem>>, vector<1x16xf32>
    %133 = vector.broadcast %132 : vector<1x16xf32> to vector<16x16xf32>
    %134 = arith.mulf %131, %133 : vector<16x16xf32>
    %c0_51 = arith.constant 0 : index
    %c0_52 = arith.constant 0 : index
    %135 = vector.load %arg14[%c0_51, %c0_52] : memref<1x16xf32, #tpu.memory_space<vmem>>, vector<1x16xf32>
    %136 = vector.broadcast %135 : vector<1x16xf32> to vector<16x16xf32>
    %137 = arith.addf %134, %136 : vector<16x16xf32>
    %138 = vector.shape_cast %137 : vector<16x16xf32> to vector<2x8x16xf32>
    %c0_53 = arith.constant 0 : index
    %c0_54 = arith.constant 0 : index
    %c0_55 = arith.constant 0 : index
    %139 = vector.load %arg15[%c0_53, %c0_54, %c0_55] : memref<2x8x16xf32, #tpu.memory_space<vmem>>, vector<2x8x16xf32>
    tpu.vector_store %arg15[%c0_53, %c0_54, %c0_55], %138 {strides = array<i32>} : memref<2x8x16xf32, #tpu.memory_space<vmem>>, vector<2x8x16xf32>,
    return
  }
  func.func @transform_0(%arg0: i32) -> (i32, i32, i32) {
    %c0_i32 = arith.constant 0 : i32
    %c0_i32_0 = arith.constant 0 : i32
    %c0_i32_1 = arith.constant 0 : i32
    return %arg0, %c0_i32, %c0_i32_0 : i32, i32, i32
  }
  func.func @transform_1(%arg0: i32) -> (i32, i32, i32) {
    %c0_i32 = arith.constant 0 : i32
    %c0_i32_0 = arith.constant 0 : i32
    %c0_i32_1 = arith.constant 0 : i32
    return %arg0, %c0_i32, %c0_i32_0 : i32, i32, i32
  }
  func.func @transform_2(%arg0: i32) -> (i32, i32) {
    %c0_i32 = arith.constant 0 : i32
    %c0_i32_0 = arith.constant 0 : i32
    %c0_i32_1 = arith.constant 0 : i32
    return %c0_i32, %c0_i32_0 : i32, i32
  }
  func.func @transform_3(%arg0: i32) -> (i32, i32) {
    %c0_i32 = arith.constant 0 : i32
    %c0_i32_0 = arith.constant 0 : i32
    %c0_i32_1 = arith.constant 0 : i32
    return %c0_i32, %c0_i32_0 : i32, i32
  }
  func.func @transform_4(%arg0: i32) -> (i32, i32) {
    %c0_i32 = arith.constant 0 : i32
    %c0_i32_0 = arith.constant 0 : i32
    %c0_i32_1 = arith.constant 0 : i32
    return %c0_i32, %c0_i32_0 : i32, i32
  }
  func.func @transform_5(%arg0: i32) -> (i32, i32) {
    %c0_i32 = arith.constant 0 : i32
    %c0_i32_0 = arith.constant 0 : i32
    %c0_i32_1 = arith.constant 0 : i32
    return %c0_i32, %c0_i32_0 : i32, i32
  }
  func.func @transform_6(%arg0: i32) -> (i32, i32) {
    %c0_i32 = arith.constant 0 : i32
    %c0_i32_0 = arith.constant 0 : i32
    %c0_i32_1 = arith.constant 0 : i32
    return %c0_i32, %c0_i32_0 : i32, i32
  }
  func.func @transform_7(%arg0: i32) -> (i32, i32) {
    %c0_i32 = arith.constant 0 : i32
    %c0_i32_0 = arith.constant 0 : i32
    %c0_i32_1 = arith.constant 0 : i32
    return %c0_i32, %c0_i32_0 : i32, i32
  }
  func.func @transform_8(%arg0: i32) -> (i32, i32) {
    %c0_i32 = arith.constant 0 : i32
    %c0_i32_0 = arith.constant 0 : i32
    %c0_i32_1 = arith.constant 0 : i32
    return %c0_i32, %c0_i32_0 : i32, i32
  }
  func.func @transform_9(%arg0: i32) -> (i32, i32) {
    %c0_i32 = arith.constant 0 : i32
    %c0_i32_0 = arith.constant 0 : i32
    %c0_i32_1 = arith.constant 0 : i32
    return %c0_i32, %c0_i32_0 : i32, i32
  }
  func.func @transform_10(%arg0: i32) -> (i32, i32) {
    %c0_i32 = arith.constant 0 : i32
    %c0_i32_0 = arith.constant 0 : i32
    %c0_i32_1 = arith.constant 0 : i32
    return %c0_i32, %c0_i32_0 : i32, i32
  }
  func.func @transform_11(%arg0: i32) -> (i32, i32) {
    %c0_i32 = arith.constant 0 : i32
    %c0_i32_0 = arith.constant 0 : i32
    %c0_i32_1 = arith.constant 0 : i32
    return %c0_i32, %c0_i32_0 : i32, i32
  }
  func.func @transform_12(%arg0: i32) -> (i32, i32) {
    %c0_i32 = arith.constant 0 : i32
    %c0_i32_0 = arith.constant 0 : i32
    %c0_i32_1 = arith.constant 0 : i32
    return %c0_i32, %c0_i32_0 : i32, i32
  }
  func.func @transform_13(%arg0: i32) -> (i32, i32) {
    %c0_i32 = arith.constant 0 : i32
    %c0_i32_0 = arith.constant 0 : i32
    %c0_i32_1 = arith.constant 0 : i32
    return %c0_i32, %c0_i32_0 : i32, i32
  }
  func.func @transform_14(%arg0: i32) -> (i32, i32, i32) {
    %c0_i32 = arith.constant 0 : i32
    %c0_i32_0 = arith.constant 0 : i32
    %c0_i32_1 = arith.constant 0 : i32
    return %arg0, %c0_i32, %c0_i32_0 : i32, i32, i32
  }
  func.func @transform_15(%arg0: i32) -> (i32, i32, i32) {
    %c0_i32 = arith.constant 0 : i32
    %c0_i32_0 = arith.constant 0 : i32
    %c0_i32_1 = arith.constant 0 : i32
    return %arg0, %c0_i32, %c0_i32_0 : i32, i32, i32
  }
}

</mosaic_0001>

<llo_original>
// kernel: tpu_custom_call.1
$region0: #{tpu_custom_call.1}
  #allocation0 [shape = 'u32[]', space=smem, size = 0x4, offset = 0x4, fixed_abs, tag = 'smem constant byte address 0x4 - core index']
  #allocation1 [shape = 'u32[144,128]{1,0:T(1,128)}', space=vmem, size = 0x12000, scoped, tag = 'internal scratch']
  %s0 = inlined_call_operand.vmem [shape: f32[2,8,16], index: 0, kind: input, shape index: {}]
  %s1 = inlined_call_operand.vmem [shape: f32[2,8,8], index: 1, kind: input, shape index: {}]
  %s2 = inlined_call_operand.vmem [shape: f32[16,48], index: 2, kind: input, shape index: {}]
  %s3 = inlined_call_operand.vmem [shape: f32[1,48], index: 3, kind: input, shape index: {}]
  %s4 = inlined_call_operand.hbm [shape: f32[16,16], index: 4, kind: input, shape index: {}]
  %s5 = inlined_call_operand.vmem [shape: f32[1,16], index: 5, kind: input, shape index: {}]
  %s6 = inlined_call_operand.vmem [shape: f32[1,16], index: 6, kind: input, shape index: {}]
  %s7 = inlined_call_operand.vmem [shape: f32[1,16], index: 7, kind: input, shape index: {}]
  %s8 = inlined_call_operand.hbm [shape: f32[16,32], index: 8, kind: input, shape index: {}]
  %s9 = inlined_call_operand.vmem [shape: f32[1,32], index: 9, kind: input, shape index: {}]
  %s10 = inlined_call_operand.vmem [shape: f32[32,16], index: 10, kind: input, shape index: {}]
  %s11 = inlined_call_operand.vmem [shape: f32[1,16], index: 11, kind: input, shape index: {}]
  %s12 = inlined_call_operand.vmem [shape: f32[1,16], index: 12, kind: input, shape index: {}]
  %s13 = inlined_call_operand.vmem [shape: f32[1,16], index: 13, kind: input, shape index: {}]
  %s14 = inlined_call_operand.hbm [shape: f32[2,8,16], index: 14, kind: output, shape index: {0}]
  %s15 = inlined_call_operand.hbm [shape: f32[2,8,8], index: 15, kind: output, shape index: {1}]
  %16 = xla_tuple %s14, %s15
  %s17 = sld [smem:[#allocation0]]
  $region82: #{tpu_custom_call.1} parent=0
    _
  %s19 = ssub.s32 1, %s17
  %s20 = scalar_select 0, %s19, %s17
  $region1: #{tpu_custom_call.1} parent=0
    #allocation2 [shape = 'u8[8192]{0}', space=vmem, size = 0x2000, scoped, tag = 'input window, operand 4, single buffered']
    #allocation3 [shape = 's32[1]{0}', space=sflag, size = 0x4, scoped, tag = 'scoped memory for tpu_custom_call.1']
    #allocation4 [shape = 's32[1]{0}', space=sflag, size = 0x4, scoped, tag = 'scoped memory for tpu_custom_call.1']
    #allocation5 [shape = 'u8[8192]{0}', space=vmem, size = 0x2000, scoped, tag = 'input window, operand 8, single buffered']
    #allocation6 [shape = 's32[1]{0}', space=sflag, size = 0x4, scoped, tag = 'scoped memory for tpu_custom_call.1']
    #allocation7 [shape = 'u8[8192]{0}', space=vmem, size = 0x2000, scoped, tag = 'output window, operand 0, single buffered']
    #allocation8 [shape = 'u8[8192]{0}', space=vmem, size = 0x2000, scoped, tag = 'output window, operand 1, single buffered']
    #allocation9 [shape = 's32[1]{0}', space=sflag, size = 0x4, scoped, tag = 'scoped memory for tpu_custom_call.1']
    %21 = vsyncpa [#allocation3], 0
    %22 = vsyncpa [#allocation6], 0
    %23 = vsyncpa [#allocation4], 0
    %24 = vsyncpa [#allocation9], 0
    // Predicated region
    $region2: #{tpu_custom_call.1} parent=1 // pred_check
      _
    $region3: #{tpu_custom_call.1} parent=1 // pred_check_branch
      %26 = sbr.rel (0) target = $region5
    $region4: #{tpu_custom_call.1} parent=1 // pred_region
      _
    $region5: #{tpu_custom_call.1} parent=1 // pred_fallthru
      _
    // Predicated region
    $region6: #{tpu_custom_call.1} parent=1 // pred_check
      _
    $region7: #{tpu_custom_call.1} parent=1 // pred_check_branch
      %28 = sbr.rel (0) target = $region9
    $region8: #{tpu_custom_call.1} parent=1 // pred_region
      _
    $region9: #{tpu_custom_call.1} parent=1 // pred_fallthru
      _
    // Predicated region
    $region10: #{tpu_custom_call.1} parent=1 // pred_check
      _
    $region11: #{tpu_custom_call.1} parent=1 // pred_check_branch
      %30 = sbr.rel (0) target = $region13
    $region12: #{tpu_custom_call.1} parent=1 // pred_region
      _
    $region13: #{tpu_custom_call.1} parent=1 // pred_fallthru
      _
    // Predicated region
    $region14: #{tpu_custom_call.1} parent=1 // pred_check
      _
    $region15: #{tpu_custom_call.1} parent=1 // pred_check_branch
      %32 = sbr.rel (0) target = $region17
    $region16: #{tpu_custom_call.1} parent=1 // pred_region
      _
    $region17: #{tpu_custom_call.1} parent=1 // pred_fallthru
      _
    // Predicated region
    $region18: #{tpu_custom_call.1} parent=1 // pred_check
      _
    $region19: #{tpu_custom_call.1} parent=1 // pred_check_branch
      %34 = sbr.rel (0) target = $region21
    $region20: #{tpu_custom_call.1} parent=1 // pred_region
      %s36 = ssub.s32 256, 256
      %37 = vsyncadd [#allocation3], %s36
      %s38 = sshll.u32 [#allocation2], 4
      %s39 = int_to_ptr.vmem [resolvable:$true] %s38
      %44 = dma.hbm_to_vmem [thread:$0]  %s4, 256, %s39, [#allocation3], 128, 128, 8
    $region21: #{tpu_custom_call.1} parent=1 // pred_fallthru
      _
    // Predicated region
    $region22: #{tpu_custom_call.1} parent=1 // pred_check
      _
    $region23: #{tpu_custom_call.1} parent=1 // pred_check_branch
      %46 = sbr.rel (0) target = $region25
    $region24: #{tpu_custom_call.1} parent=1 // pred_region
      _
    $region25: #{tpu_custom_call.1} parent=1 // pred_fallthru
      _
    // Predicated region
    $region26: #{tpu_custom_call.1} parent=1 // pred_check
      _
    $region27: #{tpu_custom_call.1} parent=1 // pred_check_branch
      %48 = sbr.rel (0) target = $region29
    $region28: #{tpu_custom_call.1} parent=1 // pred_region
      _
    $region29: #{tpu_custom_call.1} parent=1 // pred_fallthru
      _
    // Predicated region
    $region30: #{tpu_custom_call.1} parent=1 // pred_check
      _
    $region31: #{tpu_custom_call.1} parent=1 // pred_check_branch
      %50 = sbr.rel (0) target = $region33
    $region32: #{tpu_custom_call.1} parent=1 // pred_region
      _
    $region33: #{tpu_custom_call.1} parent=1 // pred_fallthru
      _
    // Predicated region
    $region34: #{tpu_custom_call.1} parent=1 // pred_check
      _
    $region35: #{tpu_custom_call.1} parent=1 // pred_check_branch
      %52 = sbr.rel (0) target = $region37
    $region36: #{tpu_custom_call.1} parent=1 // pred_region
      %s54 = ssub.s32 256, 256
      %55 = vsyncadd [#allocation6], %s54
      %s56 = sshll.u32 [#allocation5], 4
      %s57 = int_to_ptr.vmem [resolvable:$true] %s56
      %62 = dma.hbm_to_vmem [thread:$0]  %s8, 256, %s57, [#allocation6], 128, 128, 8
    $region37: #{tpu_custom_call.1} parent=1 // pred_fallthru
      _
    // Predicated region
    $region38: #{tpu_custom_call.1} parent=1 // pred_check
      _
    $region39: #{tpu_custom_call.1} parent=1 // pred_check_branch
      %64 = sbr.rel (0) target = $region41
    $region40: #{tpu_custom_call.1} parent=1 // pred_region
      _
    $region41: #{tpu_custom_call.1} parent=1 // pred_fallthru
      _
    // Predicated region
    $region42: #{tpu_custom_call.1} parent=1 // pred_check
      _
    $region43: #{tpu_custom_call.1} parent=1 // pred_check_branch
      %66 = sbr.rel (0) target = $region45
    $region44: #{tpu_custom_call.1} parent=1 // pred_region
      _
    $region45: #{tpu_custom_call.1} parent=1 // pred_fallthru
      _
    // Predicated region
    $region46: #{tpu_custom_call.1} parent=1 // pred_check
      _
    $region47: #{tpu_custom_call.1} parent=1 // pred_check_branch
      %68 = sbr.rel (0) target = $region49
    $region48: #{tpu_custom_call.1} parent=1 // pred_region
      _
    $region49: #{tpu_custom_call.1} parent=1 // pred_fallthru
      _
    // Predicated region
    $region50: #{tpu_custom_call.1} parent=1 // pred_check
      _
    $region51: #{tpu_custom_call.1} parent=1 // pred_check_branch
      %70 = sbr.rel (0) target = $region53
    $region52: #{tpu_custom_call.1} parent=1 // pred_region
      _
    $region53: #{tpu_custom_call.1} parent=1 // pred_fallthru
      _
    // Predicated region
    $region54: #{tpu_custom_call.1} parent=1 // pred_check
      _
    $region55: #{tpu_custom_call.1} parent=1 // pred_check_branch
      %72 = sbr.rel (0) target = $region57
    $region56: #{tpu_custom_call.1} parent=1 // pred_region
      _
    $region57: #{tpu_custom_call.1} parent=1 // pred_fallthru
      _
    // Predicated region
    $region58: #{tpu_custom_call.1} parent=1 // pred_check
      _
    $region59: #{tpu_custom_call.1} parent=1 // pred_check_branch
      %74 = sbr.rel (0) target = $region61
    $region60: #{tpu_custom_call.1} parent=1 // pred_region
      %75 = dma.done [#allocation3], 256
    $region61: #{tpu_custom_call.1} parent=1 // pred_fallthru
      _
    // Predicated region
    $region62: #{tpu_custom_call.1} parent=1 // pred_check
      _
    $region63: #{tpu_custom_call.1} parent=1 // pred_check_branch
      %77 = sbr.rel (0) target = $region65
    $region64: #{tpu_custom_call.1} parent=1 // pred_region
      %78 = dma.done [#allocation6], 256
    $region65: #{tpu_custom_call.1} parent=1 // pred_fallthru
      _
    %v79 = vld [vmem:[%s0] sm:$0xff]
    %v80 = vld [vmem:[%s0 + $0x8] sm:$0xff]
    %v81 = vld [vmem:[%s2] sm:$0xff]
    %v82 = vld [vmem:[%s2 + $0x8] sm:$0xff]
    %v83 = vld [vmem:[%s3] sm:$0x1]
    %v85 = vlaneseq
    %v86 = vshrl.u32 %v85, 7
    %v87 = vsub.s32 0, %v86
    %v88 = vrot.slane %v83, %v87
    %vm90 = vcmask 130048
    %v92 = vsel %vm90, %v79, 0
    %v95 = vsel %vm90, %v80, 0
    %97 = vmatprep.subr.mxu0 0.0
    %98 = vmatpush1.msra.mxu0 %v81
    %99 = vmatprep.subr.mxu0 0.0
    %100 = vmatpush1.msra.mxu0 %v82
    %101 = vmatprep.subr.mxu0 0.0
    %102 = vmatpush1.msra.mxu0 0.0
    %103 = vmatprep.subr.mxu0 0.0
    %104 = vmatpush1.msra.mxu0 0.0
    %105 = vmatprep.subr.mxu0 0.0
    %106 = vmatpush1.msra.mxu0 0.0
    %107 = vmatprep.subr.mxu0 0.0
    %108 = vmatpush1.msra.mxu0 0.0
    %109 = vmatprep.subr.mxu0 0.0
    %110 = vmatpush1.msra.mxu0 0.0
    %111 = vmatprep.subr.mxu0 0.0
    %112 = vmatpush1.msra.mxu0 0.0
    %113 = vmatprep.subr.mxu0 0.0
    %114 = vmatpush1.msra.mxu0 0.0
    %115 = vmatprep.subr.mxu0 0.0
    %116 = vmatpush1.msra.mxu0 0.0
    %117 = vmatprep.subr.mxu0 0.0
    %118 = vmatpush1.msra.mxu0 0.0
    %119 = vmatprep.subr.mxu0 0.0
    %120 = vmatpush1.msra.mxu0 0.0
    %121 = vmatprep.subr.mxu0 0.0
    %122 = vmatpush1.msra.mxu0 0.0
    %123 = vmatprep.subr.mxu0 0.0
    %124 = vmatpush1.msra.mxu0 0.0
    %125 = vmatprep.subr.mxu0 0.0
    %126 = vmatpush1.msra.mxu0 0.0
    %127 = vmatprep.subr.mxu0 0.0
    %128 = vmatpush1.msra.mxu0 0.0
    %129 = vmatprep.subr.mxu0 0.0
    %130 = vmatpush1.msra.mxu0 0.0
    %131 = vmatprep.subr.mxu0 0.0
    %132 = vmatpush1.msra.mxu0 0.0
    %133 = vmatprep.subr.mxu0 0.0
    %134 = vmatpush1.msra.mxu0 0.0
    %135 = vmatprep.subr.mxu0 0.0
    %136 = vmatpush1.msra.mxu0 0.0
    %137 = vmatprep.subr.mxu0 0.0
    %138 = vmatpush1.msra.mxu0 0.0
    %139 = vmatprep.subr.mxu0 0.0
    %140 = vmatpush1.msra.mxu0 0.0
    %141 = vmatprep.subr.mxu0 0.0
    %142 = vmatpush1.msra.mxu0 0.0
    %143 = vmatprep.subr.mxu0 0.0
    %144 = vmatpush1.msra.mxu0 0.0
    %145 = vmatprep.subr.mxu0 0.0
    %146 = vmatpush1.msra.mxu0 0.0
    %147 = vmatprep.subr.mxu0 0.0
    %148 = vmatpush1.msra.mxu0 0.0
    %149 = vmatprep.subr.mxu0 0.0
    %150 = vmatpush1.msra.mxu0 0.0
    %151 = vmatprep.subr.mxu0 0.0
    %152 = vmatpush1.msra.mxu0 0.0
    %153 = vmatprep.subr.mxu0 0.0
    %154 = vmatpush1.msra.mxu0 0.0
    %155 = vmatprep.subr.mxu0 0.0
    %156 = vmatpush1.msra.mxu0 0.0
    %157 = vmatprep.subr.mxu0 0.0
    %158 = vmatpush1.msra.mxu0 0.0
    %159 = vmatprep.subr.mxu0 0.0
    %160 = vmatpush1.msra.mxu0 0.0
    %161 = vmatprep.mubr.f32.mxu0 0.0
    %162 = vmatmul.mubr.f32.gmra.mrb[0].mxu0 %v92
    %v163 = vpop.f32.mrb[0].mxu0
    %v164 = vadd.f32 %v88, %v163
    %v165 = vpop.f32.mrb[0].mxu0
    %166 = vmatprep.mubr.f32.mxu0 0.0
    %167 = vmatmul.mubr.f32.gmra.mrb[0].mxu0 %v95
    %v168 = vpop.f32.mrb[0].mxu0
    %v169 = vadd.f32 %v88, %v168
    %v170 = vpop.f32.mrb[0].mxu0
    %171 = vdwg.mxu0
    %174 = vrot.lane.b32.xlu0 %v164, 124
    %v175 = vpop.permute.xlu0 %174
    %176 = vrot.lane.b32.xlu0 %v169, 124
    %v177 = vpop.permute.xlu0 %176
    %178 = vrot.lane.b32.xlu0 %v164, 120
    %v179 = vpop.permute.xlu0 %178
    %180 = vrot.lane.b32.xlu0 %v169, 120
    %v181 = vpop.permute.xlu0 %180
    %182 = vrot.lane.b32.xlu0 %v164, 116
    %v183 = vpop.permute.xlu0 %182
    %184 = vrot.lane.b32.xlu0 %v169, 116
    %v185 = vpop.permute.xlu0 %184
    %186 = vrot.lane.b32.xlu0 %v164, 112
    %v187 = vpop.permute.xlu0 %186
    %vm188 = vcmask 31744
    %v189 = vsel %vm188, %v164, 0
    %v191 = vsel %vm188, %v187, 0
    %193 = vmatprep.subr.mxu0 0.0
    %194 = vmatpush1.xpose.msra.mxu0 %v191
    %195 = vmatprep.subr.mxu0 0.0
    %196 = vmatpush1.xpose.msra.mxu0 0.0
    %197 = vmatprep.subr.mxu0 0.0
    %198 = vmatpush1.xpose.msra.mxu0 0.0
    %199 = vmatprep.subr.mxu0 0.0
    %200 = vmatpush1.xpose.msra.mxu0 0.0
    %201 = vmatprep.subr.mxu0 0.0
    %202 = vmatpush1.xpose.msra.mxu0 0.0
    %203 = vmatprep.subr.mxu0 0.0
    %204 = vmatpush1.xpose.msra.mxu0 0.0
    %205 = vmatprep.subr.mxu0 0.0
    %206 = vmatpush1.xpose.msra.mxu0 0.0
    %207 = vmatprep.subr.mxu0 0.0
    %208 = vmatpush1.xpose.msra.mxu0 0.0
    %209 = vmatprep.subr.mxu0 0.0
    %210 = vmatpush1.xpose.msra.mxu0 0.0
    %211 = vmatprep.subr.mxu0 0.0
    %212 = vmatpush1.xpose.msra.mxu0 0.0
    %213 = vmatprep.subr.mxu0 0.0
    %214 = vmatpush1.xpose.msra.mxu0 0.0
    %215 = vmatprep.subr.mxu0 0.0
    %216 = vmatpush1.xpose.msra.mxu0 0.0
    %217 = vmatprep.subr.mxu0 0.0
    %218 = vmatpush1.xpose.msra.mxu0 0.0
    %219 = vmatprep.subr.mxu0 0.0
    %220 = vmatpush1.xpose.msra.mxu0 0.0
    %221 = vmatprep.subr.mxu0 0.0
    %222 = vmatpush1.xpose.msra.mxu0 0.0
    %223 = vmatprep.subr.mxu0 0.0
    %224 = vmatpush1.xpose.msra.mxu0 0.0
    %225 = vmatprep.subr.mxu0 0.0
    %226 = vmatpush1.xpose.msra.mxu0 0.0
    %227 = vmatprep.subr.mxu0 0.0
    %228 = vmatpush1.xpose.msra.mxu0 0.0
    %229 = vmatprep.subr.mxu0 0.0
    %230 = vmatpush1.xpose.msra.mxu0 0.0
    %231 = vmatprep.subr.mxu0 0.0
    %232 = vmatpush1.xpose.msra.mxu0 0.0
    %233 = vmatprep.subr.mxu0 0.0
    %234 = vmatpush1.xpose.msra.mxu0 0.0
    %235 = vmatprep.subr.mxu0 0.0
    %236 = vmatpush1.xpose.msra.mxu0 0.0
    %237 = vmatprep.subr.mxu0 0.0
    %238 = vmatpush1.xpose.msra.mxu0 0.0
    %239 = vmatprep.subr.mxu0 0.0
    %240 = vmatpush1.xpose.msra.mxu0 0.0
    %241 = vmatprep.subr.mxu0 0.0
    %242 = vmatpush1.xpose.msra.mxu0 0.0
    %243 = vmatprep.subr.mxu0 0.0
    %244 = vmatpush1.xpose.msra.mxu0 0.0
    %245 = vmatprep.subr.mxu0 0.0
    %246 = vmatpush1.xpose.msra.mxu0 0.0
    %247 = vmatprep.subr.mxu0 0.0
    %248 = vmatpush1.xpose.msra.mxu0 0.0
    %249 = vmatprep.subr.mxu0 0.0
    %250 = vmatpush1.xpose.msra.mxu0 0.0
    %251 = vmatprep.subr.mxu0 0.0
    %252 = vmatpush1.xpose.msra.mxu0 0.0
    %253 = vmatprep.subr.mxu0 0.0
    %254 = vmatpush1.xpose.msra.mxu0 0.0
    %255 = vmatprep.subr.mxu0 0.0
    %256 = vmatpush1.xpose.msra.mxu0 0.0
    %257 = vmatprep.mubr.f32.mxu0 0.0
    %258 = vmatmul.mubr.f32.gmra.mrb[0].mxu0 %v189
    %v259 = vpop.f32.mrb[0].mxu0
    %v260 = vadd.f32 0.0, %v259
    %v261 = vpop.f32.mrb[0].mxu0
    %262 = vdwg.mxu0
    %263 = vrot.lane.b32.xlu0 %v169, 112
    %v264 = vpop.permute.xlu0 %263
    %v265 = vsel %vm188, %v169, 0
    %v267 = vsel %vm188, %v264, 0
    %269 = vmatprep.subr.mxu0 0.0
    %270 = vmatpush1.xpose.msra.mxu0 %v267
    %271 = vmatprep.subr.mxu0 0.0
    %272 = vmatpush1.xpose.msra.mxu0 0.0
    %273 = vmatprep.subr.mxu0 0.0
    %274 = vmatpush1.xpose.msra.mxu0 0.0
    %275 = vmatprep.subr.mxu0 0.0
    %276 = vmatpush1.xpose.msra.mxu0 0.0
    %277 = vmatprep.subr.mxu0 0.0
    %278 = vmatpush1.xpose.msra.mxu0 0.0
    %279 = vmatprep.subr.mxu0 0.0
    %280 = vmatpush1.xpose.msra.mxu0 0.0
    %281 = vmatprep.subr.mxu0 0.0
    %282 = vmatpush1.xpose.msra.mxu0 0.0
    %283 = vmatprep.subr.mxu0 0.0
    %284 = vmatpush1.xpose.msra.mxu0 0.0
    %285 = vmatprep.subr.mxu0 0.0
    %286 = vmatpush1.xpose.msra.mxu0 0.0
    %287 = vmatprep.subr.mxu0 0.0
    %288 = vmatpush1.xpose.msra.mxu0 0.0
    %289 = vmatprep.subr.mxu0 0.0
    %290 = vmatpush1.xpose.msra.mxu0 0.0
    %291 = vmatprep.subr.mxu0 0.0
    %292 = vmatpush1.xpose.msra.mxu0 0.0
    %293 = vmatprep.subr.mxu0 0.0
    %294 = vmatpush1.xpose.msra.mxu0 0.0
    %295 = vmatprep.subr.mxu0 0.0
    %296 = vmatpush1.xpose.msra.mxu0 0.0
    %297 = vmatprep.subr.mxu0 0.0
    %298 = vmatpush1.xpose.msra.mxu0 0.0
    %299 = vmatprep.subr.mxu0 0.0
    %300 = vmatpush1.xpose.msra.mxu0 0.0
    %301 = vmatprep.subr.mxu0 0.0
    %302 = vmatpush1.xpose.msra.mxu0 0.0
    %303 = vmatprep.subr.mxu0 0.0
    %304 = vmatpush1.xpose.msra.mxu0 0.0
    %305 = vmatprep.subr.mxu0 0.0
    %306 = vmatpush1.xpose.msra.mxu0 0.0
    %307 = vmatprep.subr.mxu0 0.0
    %308 = vmatpush1.xpose.msra.mxu0 0.0
    %309 = vmatprep.subr.mxu0 0.0
    %310 = vmatpush1.xpose.msra.mxu0 0.0
    %311 = vmatprep.subr.mxu0 0.0
    %312 = vmatpush1.xpose.msra.mxu0 0.0
    %313 = vmatprep.subr.mxu0 0.0
    %314 = vmatpush1.xpose.msra.mxu0 0.0
    %315 = vmatprep.subr.mxu0 0.0
    %316 = vmatpush1.xpose.msra.mxu0 0.0
    %317 = vmatprep.subr.mxu0 0.0
    %318 = vmatpush1.xpose.msra.mxu0 0.0
    %319 = vmatprep.subr.mxu0 0.0
    %320 = vmatpush1.xpose.msra.mxu0 0.0
    %321 = vmatprep.subr.mxu0 0.0
    %322 = vmatpush1.xpose.msra.mxu0 0.0
    %323 = vmatprep.subr.mxu0 0.0
    %324 = vmatpush1.xpose.msra.mxu0 0.0
    %325 = vmatprep.subr.mxu0 0.0
    %326 = vmatpush1.xpose.msra.mxu0 0.0
    %327 = vmatprep.subr.mxu0 0.0
    %328 = vmatpush1.xpose.msra.mxu0 0.0
    %329 = vmatprep.subr.mxu0 0.0
    %330 = vmatpush1.xpose.msra.mxu0 0.0
    %331 = vmatprep.subr.mxu0 0.0
    %332 = vmatpush1.xpose.msra.mxu0 0.0
    %333 = vmatprep.mubr.f32.mxu0 0.0
    %334 = vmatmul.mubr.f32.gmra.mrb[0].mxu0 %v265
    %v335 = vpop.f32.mrb[0].mxu0
    %v336 = vadd.f32 0.0, %v335
    %v337 = vpop.f32.mrb[0].mxu0
    %338 = vdwg.mxu0
    %339 = vrot.lane.b32.xlu0 %v175, 112
    %v340 = vpop.permute.xlu0 %339
    %v341 = vsel %vm188, %v175, 0
    %v343 = vsel %vm188, %v340, 0
    %345 = vmatprep.subr.mxu0 0.0
    %346 = vmatpush1.xpose.msra.mxu0 %v343
    %347 = vmatprep.subr.mxu0 0.0
    %348 = vmatpush1.xpose.msra.mxu0 0.0
    %349 = vmatprep.subr.mxu0 0.0
    %350 = vmatpush1.xpose.msra.mxu0 0.0
    %351 = vmatprep.subr.mxu0 0.0
    %352 = vmatpush1.xpose.msra.mxu0 0.0
    %353 = vmatprep.subr.mxu0 0.0
    %354 = vmatpush1.xpose.msra.mxu0 0.0
    %355 = vmatprep.subr.mxu0 0.0
    %356 = vmatpush1.xpose.msra.mxu0 0.0
    %357 = vmatprep.subr.mxu0 0.0
    %358 = vmatpush1.xpose.msra.mxu0 0.0
    %359 = vmatprep.subr.mxu0 0.0
    %360 = vmatpush1.xpose.msra.mxu0 0.0
    %361 = vmatprep.subr.mxu0 0.0
    %362 = vmatpush1.xpose.msra.mxu0 0.0
    %363 = vmatprep.subr.mxu0 0.0
    %364 = vmatpush1.xpose.msra.mxu0 0.0
    %365 = vmatprep.subr.mxu0 0.0
    %366 = vmatpush1.xpose.msra.mxu0 0.0
    %367 = vmatprep.subr.mxu0 0.0
    %368 = vmatpush1.xpose.msra.mxu0 0.0
    %369 = vmatprep.subr.mxu0 0.0
    %370 = vmatpush1.xpose.msra.mxu0 0.0
    %371 = vmatprep.subr.mxu0 0.0
    %372 = vmatpush1.xpose.msra.mxu0 0.0
    %373 = vmatprep.subr.mxu0 0.0
    %374 = vmatpush1.xpose.msra.mxu0 0.0
    %375 = vmatprep.subr.mxu0 0.0
    %376 = vmatpush1.xpose.msra.mxu0 0.0
    %377 = vmatprep.subr.mxu0 0.0
    %378 = vmatpush1.xpose.msra.mxu0 0.0
    %379 = vmatprep.subr.mxu0 0.0
    %380 = vmatpush1.xpose.msra.mxu0 0.0
    %381 = vmatprep.subr.mxu0 0.0
    %382 = vmatpush1.xpose.msra.mxu0 0.0
    %383 = vmatprep.subr.mxu0 0.0
    %384 = vmatpush1.xpose.msra.mxu0 0.0
    %385 = vmatprep.subr.mxu0 0.0
    %386 = vmatpush1.xpose.msra.mxu0 0.0
    %387 = vmatprep.subr.mxu0 0.0
    %388 = vmatpush1.xpose.msra.mxu0 0.0
    %389 = vmatprep.subr.mxu0 0.0
    %390 = vmatpush1.xpose.msra.mxu0 0.0
    %391 = vmatprep.subr.mxu0 0.0
    %392 = vmatpush1.xpose.msra.mxu0 0.0
    %393 = vmatprep.subr.mxu0 0.0
    %394 = vmatpush1.xpose.msra.mxu0 0.0
    %395 = vmatprep.subr.mxu0 0.0
    %396 = vmatpush1.xpose.msra.mxu0 0.0
    %397 = vmatprep.subr.mxu0 0.0
    %398 = vmatpush1.xpose.msra.mxu0 0.0
    %399 = vmatprep.subr.mxu0 0.0
    %400 = vmatpush1.xpose.msra.mxu0 0.0
    %401 = vmatprep.subr.mxu0 0.0
    %402 = vmatpush1.xpose.msra.mxu0 0.0
    %403 = vmatprep.subr.mxu0 0.0
    %404 = vmatpush1.xpose.msra.mxu0 0.0
    %405 = vmatprep.subr.mxu0 0.0
    %406 = vmatpush1.xpose.msra.mxu0 0.0
    %407 = vmatprep.subr.mxu0 0.0
    %408 = vmatpush1.xpose.msra.mxu0 0.0
    %409 = vmatprep.mubr.f32.mxu0 0.0
    %410 = vmatmul.mubr.f32.gmra.mrb[0].mxu0 %v341
    %v411 = vpop.f32.mrb[0].mxu0
    %v412 = vadd.f32 0.0, %v411
    %v413 = vpop.f32.mrb[0].mxu0
    %414 = vdwg.mxu0
    %415 = vrot.lane.b32.xlu0 %v177, 112
    %v416 = vpop.permute.xlu0 %415
    %v417 = vsel %vm188, %v177, 0
    %v419 = vsel %vm188, %v416, 0
    %421 = vmatprep.subr.mxu0 0.0
    %422 = vmatpush1.xpose.msra.mxu0 %v419
    %423 = vmatprep.subr.mxu0 0.0
    %424 = vmatpush1.xpose.msra.mxu0 0.0
    %425 = vmatprep.subr.mxu0 0.0
    %426 = vmatpush1.xpose.msra.mxu0 0.0
    %427 = vmatprep.subr.mxu0 0.0
    %428 = vmatpush1.xpose.msra.mxu0 0.0
    %429 = vmatprep.subr.mxu0 0.0
    %430 = vmatpush1.xpose.msra.mxu0 0.0
    %431 = vmatprep.subr.mxu0 0.0
    %432 = vmatpush1.xpose.msra.mxu0 0.0
    %433 = vmatprep.subr.mxu0 0.0
    %434 = vmatpush1.xpose.msra.mxu0 0.0
    %435 = vmatprep.subr.mxu0 0.0
    %436 = vmatpush1.xpose.msra.mxu0 0.0
    %437 = vmatprep.subr.mxu0 0.0
    %438 = vmatpush1.xpose.msra.mxu0 0.0
    %439 = vmatprep.subr.mxu0 0.0
    %440 = vmatpush1.xpose.msra.mxu0 0.0
    %441 = vmatprep.subr.mxu0 0.0
    %442 = vmatpush1.xpose.msra.mxu0 0.0
    %443 = vmatprep.subr.mxu0 0.0
    %444 = vmatpush1.xpose.msra.mxu0 0.0
    %445 = vmatprep.subr.mxu0 0.0
    %446 = vmatpush1.xpose.msra.mxu0 0.0
    %447 = vmatprep.subr.mxu0 0.0
    %448 = vmatpush1.xpose.msra.mxu0 0.0
    %449 = vmatprep.subr.mxu0 0.0
    %450 = vmatpush1.xpose.msra.mxu0 0.0
    %451 = vmatprep.subr.mxu0 0.0
    %452 = vmatpush1.xpose.msra.mxu0 0.0
    %453 = vmatprep.subr.mxu0 0.0
    %454 = vmatpush1.xpose.msra.mxu0 0.0
    %455 = vmatprep.subr.mxu0 0.0
    %456 = vmatpush1.xpose.msra.mxu0 0.0
    %457 = vmatprep.subr.mxu0 0.0
    %458 = vmatpush1.xpose.msra.mxu0 0.0
    %459 = vmatprep.subr.mxu0 0.0
    %460 = vmatpush1.xpose.msra.mxu0 0.0
    %461 = vmatprep.subr.mxu0 0.0
    %462 = vmatpush1.xpose.msra.mxu0 0.0
    %463 = vmatprep.subr.mxu0 0.0
    %464 = vmatpush1.xpose.msra.mxu0 0.0
    %465 = vmatprep.subr.mxu0 0.0
    %466 = vmatpush1.xpose.msra.mxu0 0.0
    %467 = vmatprep.subr.mxu0 0.0
    %468 = vmatpush1.xpose.msra.mxu0 0.0
    %469 = vmatprep.subr.mxu0 0.0
    %470 = vmatpush1.xpose.msra.mxu0 0.0
    %471 = vmatprep.subr.mxu0 0.0
    %472 = vmatpush1.xpose.msra.mxu0 0.0
    %473 = vmatprep.subr.mxu0 0.0
    %474 = vmatpush1.xpose.msra.mxu0 0.0
    %475 = vmatprep.subr.mxu0 0.0
    %476 = vmatpush1.xpose.msra.mxu0 0.0
    %477 = vmatprep.subr.mxu0 0.0
    %478 = vmatpush1.xpose.msra.mxu0 0.0
    %479 = vmatprep.subr.mxu0 0.0
    %480 = vmatpush1.xpose.msra.mxu0 0.0
    %481 = vmatprep.subr.mxu0 0.0
    %482 = vmatpush1.xpose.msra.mxu0 0.0
    %483 = vmatprep.subr.mxu0 0.0
    %484 = vmatpush1.xpose.msra.mxu0 0.0
    %485 = vmatprep.mubr.f32.mxu0 0.0
    %486 = vmatmul.mubr.f32.gmra.mrb[0].mxu0 %v417
    %v487 = vpop.f32.mrb[0].mxu0
    %v488 = vadd.f32 0.0, %v487
    %v489 = vpop.f32.mrb[0].mxu0
    %490 = vdwg.mxu0
    %491 = vrot.lane.b32.xlu0 %v179, 112
    %v492 = vpop.permute.xlu0 %491
    %v493 = vsel %vm188, %v179, 0
    %v495 = vsel %vm188, %v492, 0
    %497 = vmatprep.subr.mxu0 0.0
    %498 = vmatpush1.xpose.msra.mxu0 %v495
    %499 = vmatprep.subr.mxu0 0.0
    %500 = vmatpush1.xpose.msra.mxu0 0.0
    %501 = vmatprep.subr.mxu0 0.0
    %502 = vmatpush1.xpose.msra.mxu0 0.0
    %503 = vmatprep.subr.mxu0 0.0
    %504 = vmatpush1.xpose.msra.mxu0 0.0
    %505 = vmatprep.subr.mxu0 0.0
    %506 = vmatpush1.xpose.msra.mxu0 0.0
    %507 = vmatprep.subr.mxu0 0.0
    %508 = vmatpush1.xpose.msra.mxu0 0.0
    %509 = vmatprep.subr.mxu0 0.0
    %510 = vmatpush1.xpose.msra.mxu0 0.0
    %511 = vmatprep.subr.mxu0 0.0
    %512 = vmatpush1.xpose.msra.mxu0 0.0
    %513 = vmatprep.subr.mxu0 0.0
    %514 = vmatpush1.xpose.msra.mxu0 0.0
    %515 = vmatprep.subr.mxu0 0.0
    %516 = vmatpush1.xpose.msra.mxu0 0.0
    %517 = vmatprep.subr.mxu0 0.0
    %518 = vmatpush1.xpose.msra.mxu0 0.0
    %519 = vmatprep.subr.mxu0 0.0
    %520 = vmatpush1.xpose.msra.mxu0 0.0
    %521 = vmatprep.subr.mxu0 0.0
    %522 = vmatpush1.xpose.msra.mxu0 0.0
    %523 = vmatprep.subr.mxu0 0.0
    %524 = vmatpush1.xpose.msra.mxu0 0.0
    %525 = vmatprep.subr.mxu0 0.0
    %526 = vmatpush1.xpose.msra.mxu0 0.0
    %527 = vmatprep.subr.mxu0 0.0
    %528 = vmatpush1.xpose.msra.mxu0 0.0
    %529 = vmatprep.subr.mxu0 0.0
    %530 = vmatpush1.xpose.msra.mxu0 0.0
    %531 = vmatprep.subr.mxu0 0.0
    %532 = vmatpush1.xpose.msra.mxu0 0.0
    %533 = vmatprep.subr.mxu0 0.0
    %534 = vmatpush1.xpose.msra.mxu0 0.0
    %535 = vmatprep.subr.mxu0 0.0
    %536 = vmatpush1.xpose.msra.mxu0 0.0
    %537 = vmatprep.subr.mxu0 0.0
    %538 = vmatpush1.xpose.msra.mxu0 0.0
    %539 = vmatprep.subr.mxu0 0.0
    %540 = vmatpush1.xpose.msra.mxu0 0.0
    %541 = vmatprep.subr.mxu0 0.0
    %542 = vmatpush1.xpose.msra.mxu0 0.0
    %543 = vmatprep.subr.mxu0 0.0
    %544 = vmatpush1.xpose.msra.mxu0 0.0
    %545 = vmatprep.subr.mxu0 0.0
    %546 = vmatpush1.xpose.msra.mxu0 0.0
    %547 = vmatprep.subr.mxu0 0.0
    %548 = vmatpush1.xpose.msra.mxu0 0.0
    %549 = vmatprep.subr.mxu0 0.0
    %550 = vmatpush1.xpose.msra.mxu0 0.0
    %551 = vmatprep.subr.mxu0 0.0
    %552 = vmatpush1.xpose.msra.mxu0 0.0
    %553 = vmatprep.subr.mxu0 0.0
    %554 = vmatpush1.xpose.msra.mxu0 0.0
    %555 = vmatprep.subr.mxu0 0.0
    %556 = vmatpush1.xpose.msra.mxu0 0.0
    %557 = vmatprep.subr.mxu0 0.0
    %558 = vmatpush1.xpose.msra.mxu0 0.0
    %559 = vmatprep.subr.mxu0 0.0
    %560 = vmatpush1.xpose.msra.mxu0 0.0
    %561 = vmatprep.mubr.f32.mxu0 0.0
    %562 = vmatmul.mubr.f32.gmra.mrb[0].mxu0 %v493
    %v563 = vpop.f32.mrb[0].mxu0
    %v564 = vadd.f32 0.0, %v563
    %v565 = vpop.f32.mrb[0].mxu0
    %566 = vdwg.mxu0
    %567 = vrot.lane.b32.xlu0 %v181, 112
    %v568 = vpop.permute.xlu0 %567
    %v569 = vsel %vm188, %v181, 0
    %v571 = vsel %vm188, %v568, 0
    %573 = vmatprep.subr.mxu0 0.0
    %574 = vmatpush1.xpose.msra.mxu0 %v571
    %575 = vmatprep.subr.mxu0 0.0
    %576 = vmatpush1.xpose.msra.mxu0 0.0
    %577 = vmatprep.subr.mxu0 0.0
    %578 = vmatpush1.xpose.msra.mxu0 0.0
    %579 = vmatprep.subr.mxu0 0.0
    %580 = vmatpush1.xpose.msra.mxu0 0.0
    %581 = vmatprep.subr.mxu0 0.0
    %582 = vmatpush1.xpose.msra.mxu0 0.0
    %583 = vmatprep.subr.mxu0 0.0
    %584 = vmatpush1.xpose.msra.mxu0 0.0
    %585 = vmatprep.subr.mxu0 0.0
    %586 = vmatpush1.xpose.msra.mxu0 0.0
    %587 = vmatprep.subr.mxu0 0.0
    %588 = vmatpush1.xpose.msra.mxu0 0.0
    %589 = vmatprep.subr.mxu0 0.0
    %590 = vmatpush1.xpose.msra.mxu0 0.0
    %591 = vmatprep.subr.mxu0 0.0
    %592 = vmatpush1.xpose.msra.mxu0 0.0
    %593 = vmatprep.subr.mxu0 0.0
    %594 = vmatpush1.xpose.msra.mxu0 0.0
    %595 = vmatprep.subr.mxu0 0.0
    %596 = vmatpush1.xpose.msra.mxu0 0.0
    %597 = vmatprep.subr.mxu0 0.0
    %598 = vmatpush1.xpose.msra.mxu0 0.0
    %599 = vmatprep.subr.mxu0 0.0
    %600 = vmatpush1.xpose.msra.mxu0 0.0
    %601 = vmatprep.subr.mxu0 0.0
    %602 = vmatpush1.xpose.msra.mxu0 0.0
    %603 = vmatprep.subr.mxu0 0.0
    %604 = vmatpush1.xpose.msra.mxu0 0.0
    %605 = vmatprep.subr.mxu0 0.0
    %606 = vmatpush1.xpose.msra.mxu0 0.0
    %607 = vmatprep.subr.mxu0 0.0
    %608 = vmatpush1.xpose.msra.mxu0 0.0
    %609 = vmatprep.subr.mxu0 0.0
    %610 = vmatpush1.xpose.msra.mxu0 0.0
    %611 = vmatprep.subr.mxu0 0.0
    %612 = vmatpush1.xpose.msra.mxu0 0.0
    %613 = vmatprep.subr.mxu0 0.0
    %614 = vmatpush1.xpose.msra.mxu0 0.0
    %615 = vmatprep.subr.mxu0 0.0
    %616 = vmatpush1.xpose.msra.mxu0 0.0
    %617 = vmatprep.subr.mxu0 0.0
    %618 = vmatpush1.xpose.msra.mxu0 0.0
    %619 = vmatprep.subr.mxu0 0.0
    %620 = vmatpush1.xpose.msra.mxu0 0.0
    %621 = vmatprep.subr.mxu0 0.0
    %622 = vmatpush1.xpose.msra.mxu0 0.0
    %623 = vmatprep.subr.mxu0 0.0
    %624 = vmatpush1.xpose.msra.mxu0 0.0
    %625 = vmatprep.subr.mxu0 0.0
    %626 = vmatpush1.xpose.msra.mxu0 0.0
    %627 = vmatprep.subr.mxu0 0.0
    %628 = vmatpush1.xpose.msra.mxu0 0.0
    %629 = vmatprep.subr.mxu0 0.0
    %630 = vmatpush1.xpose.msra.mxu0 0.0
    %631 = vmatprep.subr.mxu0 0.0
    %632 = vmatpush1.xpose.msra.mxu0 0.0
    %633 = vmatprep.subr.mxu0 0.0
    %634 = vmatpush1.xpose.msra.mxu0 0.0
    %635 = vmatprep.subr.mxu0 0.0
    %636 = vmatpush1.xpose.msra.mxu0 0.0
    %637 = vmatprep.mubr.f32.mxu0 0.0
    %638 = vmatmul.mubr.f32.gmra.mrb[0].mxu0 %v569
    %v639 = vpop.f32.mrb[0].mxu0
    %v640 = vadd.f32 0.0, %v639
    %v641 = vpop.f32.mrb[0].mxu0
    %642 = vdwg.mxu0
    %643 = vrot.lane.b32.xlu0 %v183, 112
    %v644 = vpop.permute.xlu0 %643
    %v645 = vsel %vm188, %v183, 0
    %v647 = vsel %vm188, %v644, 0
    %649 = vmatprep.subr.mxu0 0.0
    %650 = vmatpush1.xpose.msra.mxu0 %v647
    %651 = vmatprep.subr.mxu0 0.0
    %652 = vmatpush1.xpose.msra.mxu0 0.0
    %653 = vmatprep.subr.mxu0 0.0
    %654 = vmatpush1.xpose.msra.mxu0 0.0
    %655 = vmatprep.subr.mxu0 0.0
    %656 = vmatpush1.xpose.msra.mxu0 0.0
    %657 = vmatprep.subr.mxu0 0.0
    %658 = vmatpush1.xpose.msra.mxu0 0.0
    %659 = vmatprep.subr.mxu0 0.0
    %660 = vmatpush1.xpose.msra.mxu0 0.0
    %661 = vmatprep.subr.mxu0 0.0
    %662 = vmatpush1.xpose.msra.mxu0 0.0
    %663 = vmatprep.subr.mxu0 0.0
    %664 = vmatpush1.xpose.msra.mxu0 0.0
    %665 = vmatprep.subr.mxu0 0.0
    %666 = vmatpush1.xpose.msra.mxu0 0.0
    %667 = vmatprep.subr.mxu0 0.0
    %668 = vmatpush1.xpose.msra.mxu0 0.0
    %669 = vmatprep.subr.mxu0 0.0
    %670 = vmatpush1.xpose.msra.mxu0 0.0
    %671 = vmatprep.subr.mxu0 0.0
    %672 = vmatpush1.xpose.msra.mxu0 0.0
    %673 = vmatprep.subr.mxu0 0.0
    %674 = vmatpush1.xpose.msra.mxu0 0.0
    %675 = vmatprep.subr.mxu0 0.0
    %676 = vmatpush1.xpose.msra.mxu0 0.0
    %677 = vmatprep.subr.mxu0 0.0
    %678 = vmatpush1.xpose.msra.mxu0 0.0
    %679 = vmatprep.subr.mxu0 0.0
    %680 = vmatpush1.xpose.msra.mxu0 0.0
    %681 = vmatprep.subr.mxu0 0.0
    %682 = vmatpush1.xpose.msra.mxu0 0.0
    %683 = vmatprep.subr.mxu0 0.0
    %684 = vmatpush1.xpose.msra.mxu0 0.0
    %685 = vmatprep.subr.mxu0 0.0
    %686 = vmatpush1.xpose.msra.mxu0 0.0
    %687 = vmatprep.subr.mxu0 0.0
    %688 = vmatpush1.xpose.msra.mxu0 0.0
    %689 = vmatprep.subr.mxu0 0.0
    %690 = vmatpush1.xpose.msra.mxu0 0.0
    %691 = vmatprep.subr.mxu0 0.0
    %692 = vmatpush1.xpose.msra.mxu0 0.0
    %693 = vmatprep.subr.mxu0 0.0
    %694 = vmatpush1.xpose.msra.mxu0 0.0
    %695 = vmatprep.subr.mxu0 0.0
    %696 = vmatpush1.xpose.msra.mxu0 0.0
    %697 = vmatprep.subr.mxu0 0.0
    %698 = vmatpush1.xpose.msra.mxu0 0.0
    %699 = vmatprep.subr.mxu0 0.0
    %700 = vmatpush1.xpose.msra.mxu0 0.0
    %701 = vmatprep.subr.mxu0 0.0
    %702 = vmatpush1.xpose.msra.mxu0 0.0
    %703 = vmatprep.subr.mxu0 0.0
    %704 = vmatpush1.xpose.msra.mxu0 0.0
    %705 = vmatprep.subr.mxu0 0.0
    %706 = vmatpush1.xpose.msra.mxu0 0.0
    %707 = vmatprep.subr.mxu0 0.0
    %708 = vmatpush1.xpose.msra.mxu0 0.0
    %709 = vmatprep.subr.mxu0 0.0
    %710 = vmatpush1.xpose.msra.mxu0 0.0
    %711 = vmatprep.subr.mxu0 0.0
    %712 = vmatpush1.xpose.msra.mxu0 0.0
    %713 = vmatprep.mubr.f32.mxu0 0.0
    %714 = vmatmul.mubr.f32.gmra.mrb[0].mxu0 %v645
    %v715 = vpop.f32.mrb[0].mxu0
    %v716 = vadd.f32 0.0, %v715
    %v717 = vpop.f32.mrb[0].mxu0
    %718 = vdwg.mxu0
    %719 = vrot.lane.b32.xlu0 %v185, 112
    %v720 = vpop.permute.xlu0 %719
    %v721 = vsel %vm188, %v185, 0
    %v723 = vsel %vm188, %v720, 0
    %725 = vmatprep.subr.mxu0 0.0
    %726 = vmatpush1.xpose.msra.mxu0 %v723
    %727 = vmatprep.subr.mxu0 0.0
    %728 = vmatpush1.xpose.msra.mxu0 0.0
    %729 = vmatprep.subr.mxu0 0.0
    %730 = vmatpush1.xpose.msra.mxu0 0.0
    %731 = vmatprep.subr.mxu0 0.0
    %732 = vmatpush1.xpose.msra.mxu0 0.0
    %733 = vmatprep.subr.mxu0 0.0
    %734 = vmatpush1.xpose.msra.mxu0 0.0
    %735 = vmatprep.subr.mxu0 0.0
    %736 = vmatpush1.xpose.msra.mxu0 0.0
    %737 = vmatprep.subr.mxu0 0.0
    %738 = vmatpush1.xpose.msra.mxu0 0.0
    %739 = vmatprep.subr.mxu0 0.0
    %740 = vmatpush1.xpose.msra.mxu0 0.0
    %741 = vmatprep.subr.mxu0 0.0
    %742 = vmatpush1.xpose.msra.mxu0 0.0
    %743 = vmatprep.subr.mxu0 0.0
    %744 = vmatpush1.xpose.msra.mxu0 0.0
    %745 = vmatprep.subr.mxu0 0.0
    %746 = vmatpush1.xpose.msra.mxu0 0.0
    %747 = vmatprep.subr.mxu0 0.0
    %748 = vmatpush1.xpose.msra.mxu0 0.0
    %749 = vmatprep.subr.mxu0 0.0
    %750 = vmatpush1.xpose.msra.mxu0 0.0
    %751 = vmatprep.subr.mxu0 0.0
    %752 = vmatpush1.xpose.msra.mxu0 0.0
    %753 = vmatprep.subr.mxu0 0.0
    %754 = vmatpush1.xpose.msra.mxu0 0.0
    %755 = vmatprep.subr.mxu0 0.0
    %756 = vmatpush1.xpose.msra.mxu0 0.0
    %757 = vmatprep.subr.mxu0 0.0
    %758 = vmatpush1.xpose.msra.mxu0 0.0
    %759 = vmatprep.subr.mxu0 0.0
    %760 = vmatpush1.xpose.msra.mxu0 0.0
    %761 = vmatprep.subr.mxu0 0.0
    %762 = vmatpush1.xpose.msra.mxu0 0.0
    %763 = vmatprep.subr.mxu0 0.0
    %764 = vmatpush1.xpose.msra.mxu0 0.0
    %765 = vmatprep.subr.mxu0 0.0
    %766 = vmatpush1.xpose.msra.mxu0 0.0
    %767 = vmatprep.subr.mxu0 0.0
    %768 = vmatpush1.xpose.msra.mxu0 0.0
    %769 = vmatprep.subr.mxu0 0.0
    %770 = vmatpush1.xpose.msra.mxu0 0.0
    %771 = vmatprep.subr.mxu0 0.0
    %772 = vmatpush1.xpose.msra.mxu0 0.0
    %773 = vmatprep.subr.mxu0 0.0
    %774 = vmatpush1.xpose.msra.mxu0 0.0
    %775 = vmatprep.subr.mxu0 0.0
    %776 = vmatpush1.xpose.msra.mxu0 0.0
    %777 = vmatprep.subr.mxu0 0.0
    %778 = vmatpush1.xpose.msra.mxu0 0.0
    %779 = vmatprep.subr.mxu0 0.0
    %780 = vmatpush1.xpose.msra.mxu0 0.0
    %781 = vmatprep.subr.mxu0 0.0
    %782 = vmatpush1.xpose.msra.mxu0 0.0
    %783 = vmatprep.subr.mxu0 0.0
    %784 = vmatpush1.xpose.msra.mxu0 0.0
    %785 = vmatprep.subr.mxu0 0.0
    %786 = vmatpush1.xpose.msra.mxu0 0.0
    %787 = vmatprep.subr.mxu0 0.0
    %788 = vmatpush1.xpose.msra.mxu0 0.0
    %789 = vmatprep.mubr.f32.mxu0 0.0
    %790 = vmatmul.mubr.f32.gmra.mrb[0].mxu0 %v721
    %v791 = vpop.f32.mrb[0].mxu0
    %v792 = vadd.f32 0.0, %v791
    %v793 = vpop.f32.mrb[0].mxu0
    %794 = vdwg.mxu0
    %v795 = vmul.f32 %v260, 0.5
    %v796 = vmul.f32 %v336, 0.5
    %v797 = vmul.f32 %v412, 0.5
    %v798 = vmul.f32 %v488, 0.5
    %v799 = vmul.f32 %v564, 0.5
    %v800 = vmul.f32 %v640, 0.5
    %v801 = vmul.f32 %v716, 0.5
    %v802 = vmul.f32 %v792, 0.5
    %v803 = vld [vmem:[%s1] sm:$0xff]
    %v804 = vld [vmem:[%s1 + $0x8] sm:$0xff]
    %v805 = vadd.f32 %v795, %v803
    %v806 = vadd.f32 %v796, %v804
    %v807 = vadd.f32 %v797, %v803
    %v808 = vadd.f32 %v798, %v804
    %v809 = vadd.f32 %v799, %v803
    %v810 = vadd.f32 %v800, %v804
    %v811 = vadd.f32 %v801, %v803
    %v812 = vadd.f32 %v802, %v804
    %vm813 = vcmask 64512
    %v814 = vsel %vm813, %v805, -inf
    %815 = vmax.xlane.f32.xlu0 %v814
    %v816 = vpop.xlane.xlu0 %815
    %v817 = vsel %vm813, %v806, -inf
    %818 = vmax.xlane.f32.xlu0 %v817
    %v819 = vpop.xlane.xlu0 %818
    %v820 = vsel %vm813, %v807, -inf
    %821 = vmax.xlane.f32.xlu0 %v820
    %v822 = vpop.xlane.xlu0 %821
    %v823 = vsel %vm813, %v808, -inf
    %824 = vmax.xlane.f32.xlu0 %v823
    %v825 = vpop.xlane.xlu0 %824
    %v826 = vsel %vm813, %v809, -inf
    %827 = vmax.xlane.f32.xlu0 %v826
    %v828 = vpop.xlane.xlu0 %827
    %v829 = vsel %vm813, %v810, -inf
    %830 = vmax.xlane.f32.xlu0 %v829
    %v831 = vpop.xlane.xlu0 %830
    %v832 = vsel %vm813, %v811, -inf
    %833 = vmax.xlane.f32.xlu0 %v832
    %v834 = vpop.xlane.xlu0 %833
    %v835 = vsel %vm813, %v812, -inf
    %836 = vmax.xlane.f32.xlu0 %v835
    %v837 = vpop.xlane.xlu0 %836
    %v838 = vsub.f32 %v805, %v816
    %v839 = vsub.f32 %v806, %v819
    %v840 = vsub.f32 %v807, %v822
    %v841 = vsub.f32 %v808, %v825
    %v842 = vsub.f32 %v809, %v828
    %v843 = vsub.f32 %v810, %v831
    %v844 = vsub.f32 %v811, %v834
    %v845 = vsub.f32 %v812, %v837
    %v846 = vmul.f32 %v838, 1.442695
    %v847 = vpow.pop %v846
    %v848 = vmul.f32 %v839, 1.442695
    %v849 = vpow.pop %v848
    %v850 = vmul.f32 %v840, 1.442695
    %v851 = vpow.pop %v850
    %v852 = vmul.f32 %v841, 1.442695
    %v853 = vpow.pop %v852
    %v854 = vmul.f32 %v842, 1.442695
    %v855 = vpow.pop %v854
    %v856 = vmul.f32 %v843, 1.442695
    %v857 = vpow.pop %v856
    %v858 = vmul.f32 %v844, 1.442695
    %v859 = vpow.pop %v858
    %v860 = vmul.f32 %v845, 1.442695
    %v861 = vpow.pop %v860
    %v862 = vsel %vm813, %v847, 0.0
    %863 = vadd.xlane.f32.xlu0 %v862
    %v864 = vpop.xlane.xlu0 %863
    %v865 = vsel %vm813, %v849, 0.0
    %866 = vadd.xlane.f32.xlu0 %v865
    %v867 = vpop.xlane.xlu0 %866
    %v868 = vsel %vm813, %v851, 0.0
    %869 = vadd.xlane.f32.xlu0 %v868
    %v870 = vpop.xlane.xlu0 %869
    %v871 = vsel %vm813, %v853, 0.0
    %872 = vadd.xlane.f32.xlu0 %v871
    %v873 = vpop.xlane.xlu0 %872
    %v874 = vsel %vm813, %v855, 0.0
    %875 = vadd.xlane.f32.xlu0 %v874
    %v876 = vpop.xlane.xlu0 %875
    %v877 = vsel %vm813, %v857, 0.0
    %878 = vadd.xlane.f32.xlu0 %v877
    %v879 = vpop.xlane.xlu0 %878
    %v880 = vsel %vm813, %v859, 0.0
    %881 = vadd.xlane.f32.xlu0 %v880
    %v882 = vpop.xlane.xlu0 %881
    %v883 = vsel %vm813, %v861, 0.0
    %884 = vadd.xlane.f32.xlu0 %v883
    %v885 = vpop.xlane.xlu0 %884
    %v886 = vrcp.pop %v864
    %v887 = vrcp.pop %v867
    %v888 = vrcp.pop %v870
    %v889 = vrcp.pop %v873
    %v890 = vrcp.pop %v876
    %v891 = vrcp.pop %v879
    %v892 = vrcp.pop %v882
    %v893 = vrcp.pop %v885
    %v894 = vmul.f32 %v847, %v886
    %v895 = vmul.f32 %v849, %v887
    %v896 = vmul.f32 %v851, %v888
    %v897 = vmul.f32 %v853, %v889
    %v898 = vmul.f32 %v855, %v890
    %v899 = vmul.f32 %v857, %v891
    %v900 = vmul.f32 %v859, %v892
    %v901 = vmul.f32 %v861, %v893
    %v902 = vsel %vm813, %v894, 0.0
    %v903 = vsel %vm813, %v896, 0.0
    %v904 = vadd.f32 %v902, %v903
    %v905 = vsel %vm813, %v898, 0.0
    %v906 = vadd.f32 %v904, %v905
    %v907 = vsel %vm813, %v900, 0.0
    %v908 = vadd.f32 %v906, %v907
    %v909 = vsel %vm813, %v895, 0.0
    %v910 = vsel %vm813, %v897, 0.0
    %v911 = vadd.f32 %v909, %v910
    %v912 = vsel %vm813, %v899, 0.0
    %v913 = vadd.f32 %v911, %v912
    %v914 = vsel %vm813, %v901, 0.0
    %v915 = vadd.f32 %v913, %v914
    %v916 = vrcp.pop 4.0
    %v917 = vmul.f32 %v908, %v916
    %v918 = vmul.f32 %v915, %v916
    %919 = vst.msk [vmem:[#allocation8] sm:$0xff] %vm813, %v917
    %920 = vst.msk [vmem:[#allocation8 + $0x8] sm:$0xff] %vm813, %v918
    %921 = vrot.lane.b32.xlu0 %v164, 96
    %v922 = vpop.permute.xlu0 %921
    %v925 = vsel %vm813, %v894, 0
    %927 = vmatprep.subr.mxu0 0.0
    %928 = vmatpush1.msra.mxu0 %v922
    %929 = vmatprep.subr.mxu0 0.0
    %930 = vmatpush1.msra.mxu0 0.0
    %931 = vmatprep.subr.mxu0 0.0
    %932 = vmatpush1.msra.mxu0 0.0
    %933 = vmatprep.subr.mxu0 0.0
    %934 = vmatpush1.msra.mxu0 0.0
    %935 = vmatprep.subr.mxu0 0.0
    %936 = vmatpush1.msra.mxu0 0.0
    %937 = vmatprep.subr.mxu0 0.0
    %938 = vmatpush1.msra.mxu0 0.0
    %939 = vmatprep.subr.mxu0 0.0
    %940 = vmatpush1.msra.mxu0 0.0
    %941 = vmatprep.subr.mxu0 0.0
    %942 = vmatpush1.msra.mxu0 0.0
    %943 = vmatprep.subr.mxu0 0.0
    %944 = vmatpush1.msra.mxu0 0.0
    %945 = vmatprep.subr.mxu0 0.0
    %946 = vmatpush1.msra.mxu0 0.0
    %947 = vmatprep.subr.mxu0 0.0
    %948 = vmatpush1.msra.mxu0 0.0
    %949 = vmatprep.subr.mxu0 0.0
    %950 = vmatpush1.msra.mxu0 0.0
    %951 = vmatprep.subr.mxu0 0.0
    %952 = vmatpush1.msra.mxu0 0.0
    %953 = vmatprep.subr.mxu0 0.0
    %954 = vmatpush1.msra.mxu0 0.0
    %955 = vmatprep.subr.mxu0 0.0
    %956 = vmatpush1.msra.mxu0 0.0
    %957 = vmatprep.subr.mxu0 0.0
    %958 = vmatpush1.msra.mxu0 0.0
    %959 = vmatprep.subr.mxu0 0.0
    %960 = vmatpush1.msra.mxu0 0.0
    %961 = vmatprep.subr.mxu0 0.0
    %962 = vmatpush1.msra.mxu0 0.0
    %963 = vmatprep.subr.mxu0 0.0
    %964 = vmatpush1.msra.mxu0 0.0
    %965 = vmatprep.subr.mxu0 0.0
    %966 = vmatpush1.msra.mxu0 0.0
    %967 = vmatprep.subr.mxu0 0.0
    %968 = vmatpush1.msra.mxu0 0.0
    %969 = vmatprep.subr.mxu0 0.0
    %970 = vmatpush1.msra.mxu0 0.0
    %971 = vmatprep.subr.mxu0 0.0
    %972 = vmatpush1.msra.mxu0 0.0
    %973 = vmatprep.subr.mxu0 0.0
    %974 = vmatpush1.msra.mxu0 0.0
    %975 = vmatprep.subr.mxu0 0.0
    %976 = vmatpush1.msra.mxu0 0.0
    %977 = vmatprep.subr.mxu0 0.0
    %978 = vmatpush1.msra.mxu0 0.0
    %979 = vmatprep.subr.mxu0 0.0
    %980 = vmatpush1.msra.mxu0 0.0
    %981 = vmatprep.subr.mxu0 0.0
    %982 = vmatpush1.msra.mxu0 0.0
    %983 = vmatprep.subr.mxu0 0.0
    %984 = vmatpush1.msra.mxu0 0.0
    %985 = vmatprep.subr.mxu0 0.0
    %986 = vmatpush1.msra.mxu0 0.0
    %987 = vmatprep.subr.mxu0 0.0
    %988 = vmatpush1.msra.mxu0 0.0
    %989 = vmatprep.subr.mxu0 0.0
    %990 = vmatpush1.msra.mxu0 0.0
    %991 = vmatprep.mubr.f32.mxu0 0.0
    %992 = vmatmul.mubr.f32.gmra.mrb[0].mxu0 %v925
    %v993 = vpop.f32.mrb[0].mxu0
    %v994 = vadd.f32 0.0, %v993
    %v995 = vpop.f32.mrb[0].mxu0
    %996 = vdwg.mxu0
    %997 = vrot.lane.b32.xlu0 %v169, 96
    %v998 = vpop.permute.xlu0 %997
    %v1001 = vsel %vm813, %v895, 0
    %1003 = vmatprep.subr.mxu0 0.0
    %1004 = vmatpush1.msra.mxu0 %v998
    %1005 = vmatprep.subr.mxu0 0.0
    %1006 = vmatpush1.msra.mxu0 0.0
    %1007 = vmatprep.subr.mxu0 0.0
    %1008 = vmatpush1.msra.mxu0 0.0
    %1009 = vmatprep.subr.mxu0 0.0
    %1010 = vmatpush1.msra.mxu0 0.0
    %1011 = vmatprep.subr.mxu0 0.0
    %1012 = vmatpush1.msra.mxu0 0.0
    %1013 = vmatprep.subr.mxu0 0.0
    %1014 = vmatpush1.msra.mxu0 0.0
    %1015 = vmatprep.subr.mxu0 0.0
    %1016 = vmatpush1.msra.mxu0 0.0
    %1017 = vmatprep.subr.mxu0 0.0
    %1018 = vmatpush1.msra.mxu0 0.0
    %1019 = vmatprep.subr.mxu0 0.0
    %1020 = vmatpush1.msra.mxu0 0.0
    %1021 = vmatprep.subr.mxu0 0.0
    %1022 = vmatpush1.msra.mxu0 0.0
    %1023 = vmatprep.subr.mxu0 0.0
    %1024 = vmatpush1.msra.mxu0 0.0
    %1025 = vmatprep.subr.mxu0 0.0
    %1026 = vmatpush1.msra.mxu0 0.0
    %1027 = vmatprep.subr.mxu0 0.0
    %1028 = vmatpush1.msra.mxu0 0.0
    %1029 = vmatprep.subr.mxu0 0.0
    %1030 = vmatpush1.msra.mxu0 0.0
    %1031 = vmatprep.subr.mxu0 0.0
    %1032 = vmatpush1.msra.mxu0 0.0
    %1033 = vmatprep.subr.mxu0 0.0
    %1034 = vmatpush1.msra.mxu0 0.0
    %1035 = vmatprep.subr.mxu0 0.0
    %1036 = vmatpush1.msra.mxu0 0.0
    %1037 = vmatprep.subr.mxu0 0.0
    %1038 = vmatpush1.msra.mxu0 0.0
    %1039 = vmatprep.subr.mxu0 0.0
    %1040 = vmatpush1.msra.mxu0 0.0
    %1041 = vmatprep.subr.mxu0 0.0
    %1042 = vmatpush1.msra.mxu0 0.0
    %1043 = vmatprep.subr.mxu0 0.0
    %1044 = vmatpush1.msra.mxu0 0.0
    %1045 = vmatprep.subr.mxu0 0.0
    %1046 = vmatpush1.msra.mxu0 0.0
    %1047 = vmatprep.subr.mxu0 0.0
    %1048 = vmatpush1.msra.mxu0 0.0
    %1049 = vmatprep.subr.mxu0 0.0
    %1050 = vmatpush1.msra.mxu0 0.0
    %1051 = vmatprep.subr.mxu0 0.0
    %1052 = vmatpush1.msra.mxu0 0.0
    %1053 = vmatprep.subr.mxu0 0.0
    %1054 = vmatpush1.msra.mxu0 0.0
    %1055 = vmatprep.subr.mxu0 0.0
    %1056 = vmatpush1.msra.mxu0 0.0
    %1057 = vmatprep.subr.mxu0 0.0
    %1058 = vmatpush1.msra.mxu0 0.0
    %1059 = vmatprep.subr.mxu0 0.0
    %1060 = vmatpush1.msra.mxu0 0.0
    %1061 = vmatprep.subr.mxu0 0.0
    %1062 = vmatpush1.msra.mxu0 0.0
    %1063 = vmatprep.subr.mxu0 0.0
    %1064 = vmatpush1.msra.mxu0 0.0
    %1065 = vmatprep.subr.mxu0 0.0
    %1066 = vmatpush1.msra.mxu0 0.0
    %1067 = vmatprep.mubr.f32.mxu0 0.0
    %1068 = vmatmul.mubr.f32.gmra.mrb[0].mxu0 %v1001
    %v1069 = vpop.f32.mrb[0].mxu0
    %v1070 = vadd.f32 0.0, %v1069
    %v1071 = vpop.f32.mrb[0].mxu0
    %1072 = vdwg.mxu0
    %1073 = vrot.lane.b32.xlu0 %v175, 96
    %v1074 = vpop.permute.xlu0 %1073
    %v1077 = vsel %vm813, %v896, 0
    %1079 = vmatprep.subr.mxu0 0.0
    %1080 = vmatpush1.msra.mxu0 %v1074
    %1081 = vmatprep.subr.mxu0 0.0
    %1082 = vmatpush1.msra.mxu0 0.0
    %1083 = vmatprep.subr.mxu0 0.0
    %1084 = vmatpush1.msra.mxu0 0.0
    %1085 = vmatprep.subr.mxu0 0.0
    %1086 = vmatpush1.msra.mxu0 0.0
    %1087 = vmatprep.subr.mxu0 0.0
    %1088 = vmatpush1.msra.mxu0 0.0
    %1089 = vmatprep.subr.mxu0 0.0
    %1090 = vmatpush1.msra.mxu0 0.0
    %1091 = vmatprep.subr.mxu0 0.0
    %1092 = vmatpush1.msra.mxu0 0.0
    %1093 = vmatprep.subr.mxu0 0.0
    %1094 = vmatpush1.msra.mxu0 0.0
    %1095 = vmatprep.subr.mxu0 0.0
    %1096 = vmatpush1.msra.mxu0 0.0
    %1097 = vmatprep.subr.mxu0 0.0
    %1098 = vmatpush1.msra.mxu0 0.0
    %1099 = vmatprep.subr.mxu0 0.0
    %1100 = vmatpush1.msra.mxu0 0.0
    %1101 = vmatprep.subr.mxu0 0.0
    %1102 = vmatpush1.msra.mxu0 0.0
    %1103 = vmatprep.subr.mxu0 0.0
    %1104 = vmatpush1.msra.mxu0 0.0
    %1105 = vmatprep.subr.mxu0 0.0
    %1106 = vmatpush1.msra.mxu0 0.0
    %1107 = vmatprep.subr.mxu0 0.0
    %1108 = vmatpush1.msra.mxu0 0.0
    %1109 = vmatprep.subr.mxu0 0.0
    %1110 = vmatpush1.msra.mxu0 0.0
    %1111 = vmatprep.subr.mxu0 0.0
    %1112 = vmatpush1.msra.mxu0 0.0
    %1113 = vmatprep.subr.mxu0 0.0
    %1114 = vmatpush1.msra.mxu0 0.0
    %1115 = vmatprep.subr.mxu0 0.0
    %1116 = vmatpush1.msra.mxu0 0.0
    %1117 = vmatprep.subr.mxu0 0.0
    %1118 = vmatpush1.msra.mxu0 0.0
    %1119 = vmatprep.subr.mxu0 0.0
    %1120 = vmatpush1.msra.mxu0 0.0
    %1121 = vmatprep.subr.mxu0 0.0
    %1122 = vmatpush1.msra.mxu0 0.0
    %1123 = vmatprep.subr.mxu0 0.0
    %1124 = vmatpush1.msra.mxu0 0.0
    %1125 = vmatprep.subr.mxu0 0.0
    %1126 = vmatpush1.msra.mxu0 0.0
    %1127 = vmatprep.subr.mxu0 0.0
    %1128 = vmatpush1.msra.mxu0 0.0
    %1129 = vmatprep.subr.mxu0 0.0
    %1130 = vmatpush1.msra.mxu0 0.0
    %1131 = vmatprep.subr.mxu0 0.0
    %1132 = vmatpush1.msra.mxu0 0.0
    %1133 = vmatprep.subr.mxu0 0.0
    %1134 = vmatpush1.msra.mxu0 0.0
    %1135 = vmatprep.subr.mxu0 0.0
    %1136 = vmatpush1.msra.mxu0 0.0
    %1137 = vmatprep.subr.mxu0 0.0
    %1138 = vmatpush1.msra.mxu0 0.0
    %1139 = vmatprep.subr.mxu0 0.0
    %1140 = vmatpush1.msra.mxu0 0.0
    %1141 = vmatprep.subr.mxu0 0.0
    %1142 = vmatpush1.msra.mxu0 0.0
    %1143 = vmatprep.mubr.f32.mxu0 0.0
    %1144 = vmatmul.mubr.f32.gmra.mrb[0].mxu0 %v1077
    %v1145 = vpop.f32.mrb[0].mxu0
    %v1146 = vadd.f32 0.0, %v1145
    %v1147 = vpop.f32.mrb[0].mxu0
    %1148 = vdwg.mxu0
    %1149 = vrot.lane.b32.xlu0 %v177, 96
    %v1150 = vpop.permute.xlu0 %1149
    %v1153 = vsel %vm813, %v897, 0
    %1155 = vmatprep.subr.mxu0 0.0
    %1156 = vmatpush1.msra.mxu0 %v1150
    %1157 = vmatprep.subr.mxu0 0.0
    %1158 = vmatpush1.msra.mxu0 0.0
    %1159 = vmatprep.subr.mxu0 0.0
    %1160 = vmatpush1.msra.mxu0 0.0
    %1161 = vmatprep.subr.mxu0 0.0
    %1162 = vmatpush1.msra.mxu0 0.0
    %1163 = vmatprep.subr.mxu0 0.0
    %1164 = vmatpush1.msra.mxu0 0.0
    %1165 = vmatprep.subr.mxu0 0.0
    %1166 = vmatpush1.msra.mxu0 0.0
    %1167 = vmatprep.subr.mxu0 0.0
    %1168 = vmatpush1.msra.mxu0 0.0
    %1169 = vmatprep.subr.mxu0 0.0
    %1170 = vmatpush1.msra.mxu0 0.0
    %1171 = vmatprep.subr.mxu0 0.0
    %1172 = vmatpush1.msra.mxu0 0.0
    %1173 = vmatprep.subr.mxu0 0.0
    %1174 = vmatpush1.msra.mxu0 0.0
    %1175 = vmatprep.subr.mxu0 0.0
    %1176 = vmatpush1.msra.mxu0 0.0
    %1177 = vmatprep.subr.mxu0 0.0
    %1178 = vmatpush1.msra.mxu0 0.0
    %1179 = vmatprep.subr.mxu0 0.0
    %1180 = vmatpush1.msra.mxu0 0.0
    %1181 = vmatprep.subr.mxu0 0.0
    %1182 = vmatpush1.msra.mxu0 0.0
    %1183 = vmatprep.subr.mxu0 0.0
    %1184 = vmatpush1.msra.mxu0 0.0
    %1185 = vmatprep.subr.mxu0 0.0
    %1186 = vmatpush1.msra.mxu0 0.0
    %1187 = vmatprep.subr.mxu0 0.0
    %1188 = vmatpush1.msra.mxu0 0.0
    %1189 = vmatprep.subr.mxu0 0.0
    %1190 = vmatpush1.msra.mxu0 0.0
    %1191 = vmatprep.subr.mxu0 0.0
    %1192 = vmatpush1.msra.mxu0 0.0
    %1193 = vmatprep.subr.mxu0 0.0
    %1194 = vmatpush1.msra.mxu0 0.0
    %1195 = vmatprep.subr.mxu0 0.0
    %1196 = vmatpush1.msra.mxu0 0.0
    %1197 = vmatprep.subr.mxu0 0.0
    %1198 = vmatpush1.msra.mxu0 0.0
    %1199 = vmatprep.subr.mxu0 0.0
    %1200 = vmatpush1.msra.mxu0 0.0
    %1201 = vmatprep.subr.mxu0 0.0
    %1202 = vmatpush1.msra.mxu0 0.0
    %1203 = vmatprep.subr.mxu0 0.0
    %1204 = vmatpush1.msra.mxu0 0.0
    %1205 = vmatprep.subr.mxu0 0.0
    %1206 = vmatpush1.msra.mxu0 0.0
    %1207 = vmatprep.subr.mxu0 0.0
    %1208 = vmatpush1.msra.mxu0 0.0
    %1209 = vmatprep.subr.mxu0 0.0
    %1210 = vmatpush1.msra.mxu0 0.0
    %1211 = vmatprep.subr.mxu0 0.0
    %1212 = vmatpush1.msra.mxu0 0.0
    %1213 = vmatprep.subr.mxu0 0.0
    %1214 = vmatpush1.msra.mxu0 0.0
    %1215 = vmatprep.subr.mxu0 0.0
    %1216 = vmatpush1.msra.mxu0 0.0
    %1217 = vmatprep.subr.mxu0 0.0
    %1218 = vmatpush1.msra.mxu0 0.0
    %1219 = vmatprep.mubr.f32.mxu0 0.0
    %1220 = vmatmul.mubr.f32.gmra.mrb[0].mxu0 %v1153
    %v1221 = vpop.f32.mrb[0].mxu0
    %v1222 = vadd.f32 0.0, %v1221
    %v1223 = vpop.f32.mrb[0].mxu0
    %1224 = vdwg.mxu0
    %1225 = vrot.lane.b32.xlu0 %v179, 96
    %v1226 = vpop.permute.xlu0 %1225
    %v1229 = vsel %vm813, %v898, 0
    %1231 = vmatprep.subr.mxu0 0.0
    %1232 = vmatpush1.msra.mxu0 %v1226
    %1233 = vmatprep.subr.mxu0 0.0
    %1234 = vmatpush1.msra.mxu0 0.0
    %1235 = vmatprep.subr.mxu0 0.0
    %1236 = vmatpush1.msra.mxu0 0.0
    %1237 = vmatprep.subr.mxu0 0.0
    %1238 = vmatpush1.msra.mxu0 0.0
    %1239 = vmatprep.subr.mxu0 0.0
    %1240 = vmatpush1.msra.mxu0 0.0
    %1241 = vmatprep.subr.mxu0 0.0
    %1242 = vmatpush1.msra.mxu0 0.0
    %1243 = vmatprep.subr.mxu0 0.0
    %1244 = vmatpush1.msra.mxu0 0.0
    %1245 = vmatprep.subr.mxu0 0.0
    %1246 = vmatpush1.msra.mxu0 0.0
    %1247 = vmatprep.subr.mxu0 0.0
    %1248 = vmatpush1.msra.mxu0 0.0
    %1249 = vmatprep.subr.mxu0 0.0
    %1250 = vmatpush1.msra.mxu0 0.0
    %1251 = vmatprep.subr.mxu0 0.0
    %1252 = vmatpush1.msra.mxu0 0.0
    %1253 = vmatprep.subr.mxu0 0.0
    %1254 = vmatpush1.msra.mxu0 0.0
    %1255 = vmatprep.subr.mxu0 0.0
    %1256 = vmatpush1.msra.mxu0 0.0
    %1257 = vmatprep.subr.mxu0 0.0
    %1258 = vmatpush1.msra.mxu0 0.0
    %1259 = vmatprep.subr.mxu0 0.0
    %1260 = vmatpush1.msra.mxu0 0.0
    %1261 = vmatprep.subr.mxu0 0.0
    %1262 = vmatpush1.msra.mxu0 0.0
    %1263 = vmatprep.subr.mxu0 0.0
    %1264 = vmatpush1.msra.mxu0 0.0
    %1265 = vmatprep.subr.mxu0 0.0
    %1266 = vmatpush1.msra.mxu0 0.0
    %1267 = vmatprep.subr.mxu0 0.0
    %1268 = vmatpush1.msra.mxu0 0.0
    %1269 = vmatprep.subr.mxu0 0.0
    %1270 = vmatpush1.msra.mxu0 0.0
    %1271 = vmatprep.subr.mxu0 0.0
    %1272 = vmatpush1.msra.mxu0 0.0
    %1273 = vmatprep.subr.mxu0 0.0
    %1274 = vmatpush1.msra.mxu0 0.0
    %1275 = vmatprep.subr.mxu0 0.0
    %1276 = vmatpush1.msra.mxu0 0.0
    %1277 = vmatprep.subr.mxu0 0.0
    %1278 = vmatpush1.msra.mxu0 0.0
    %1279 = vmatprep.subr.mxu0 0.0
    %1280 = vmatpush1.msra.mxu0 0.0
    %1281 = vmatprep.subr.mxu0 0.0
    %1282 = vmatpush1.msra.mxu0 0.0
    %1283 = vmatprep.subr.mxu0 0.0
    %1284 = vmatpush1.msra.mxu0 0.0
    %1285 = vmatprep.subr.mxu0 0.0
    %1286 = vmatpush1.msra.mxu0 0.0
    %1287 = vmatprep.subr.mxu0 0.0
    %1288 = vmatpush1.msra.mxu0 0.0
    %1289 = vmatprep.subr.mxu0 0.0
    %1290 = vmatpush1.msra.mxu0 0.0
    %1291 = vmatprep.subr.mxu0 0.0
    %1292 = vmatpush1.msra.mxu0 0.0
    %1293 = vmatprep.subr.mxu0 0.0
    %1294 = vmatpush1.msra.mxu0 0.0
    %1295 = vmatprep.mubr.f32.mxu0 0.0
    %1296 = vmatmul.mubr.f32.gmra.mrb[0].mxu0 %v1229
    %v1297 = vpop.f32.mrb[0].mxu0
    %v1298 = vadd.f32 0.0, %v1297
    %v1299 = vpop.f32.mrb[0].mxu0
    %1300 = vdwg.mxu0
    %1301 = vrot.lane.b32.xlu0 %v181, 96
    %v1302 = vpop.permute.xlu0 %1301
    %v1305 = vsel %vm813, %v899, 0
    %1307 = vmatprep.subr.mxu0 0.0
    %1308 = vmatpush1.msra.mxu0 %v1302
    %1309 = vmatprep.subr.mxu0 0.0
    %1310 = vmatpush1.msra.mxu0 0.0
    %1311 = vmatprep.subr.mxu0 0.0
    %1312 = vmatpush1.msra.mxu0 0.0
    %1313 = vmatprep.subr.mxu0 0.0
    %1314 = vmatpush1.msra.mxu0 0.0
    %1315 = vmatprep.subr.mxu0 0.0
    %1316 = vmatpush1.msra.mxu0 0.0
    %1317 = vmatprep.subr.mxu0 0.0
    %1318 = vmatpush1.msra.mxu0 0.0
    %1319 = vmatprep.subr.mxu0 0.0
    %1320 = vmatpush1.msra.mxu0 0.0
    %1321 = vmatprep.subr.mxu0 0.0
    %1322 = vmatpush1.msra.mxu0 0.0
    %1323 = vmatprep.subr.mxu0 0.0
    %1324 = vmatpush1.msra.mxu0 0.0
    %1325 = vmatprep.subr.mxu0 0.0
    %1326 = vmatpush1.msra.mxu0 0.0
    %1327 = vmatprep.subr.mxu0 0.0
    %1328 = vmatpush1.msra.mxu0 0.0
    %1329 = vmatprep.subr.mxu0 0.0
    %1330 = vmatpush1.msra.mxu0 0.0
    %1331 = vmatprep.subr.mxu0 0.0
    %1332 = vmatpush1.msra.mxu0 0.0
    %1333 = vmatprep.subr.mxu0 0.0
    %1334 = vmatpush1.msra.mxu0 0.0
    %1335 = vmatprep.subr.mxu0 0.0
    %1336 = vmatpush1.msra.mxu0 0.0
    %1337 = vmatprep.subr.mxu0 0.0
    %1338 = vmatpush1.msra.mxu0 0.0
    %1339 = vmatprep.subr.mxu0 0.0
    %1340 = vmatpush1.msra.mxu0 0.0
    %1341 = vmatprep.subr.mxu0 0.0
    %1342 = vmatpush1.msra.mxu0 0.0
    %1343 = vmatprep.subr.mxu0 0.0
    %1344 = vmatpush1.msra.mxu0 0.0
    %1345 = vmatprep.subr.mxu0 0.0
    %1346 = vmatpush1.msra.mxu0 0.0
    %1347 = vmatprep.subr.mxu0 0.0
    %1348 = vmatpush1.msra.mxu0 0.0
    %1349 = vmatprep.subr.mxu0 0.0
    %1350 = vmatpush1.msra.mxu0 0.0
    %1351 = vmatprep.subr.mxu0 0.0
    %1352 = vmatpush1.msra.mxu0 0.0
    %1353 = vmatprep.subr.mxu0 0.0
    %1354 = vmatpush1.msra.mxu0 0.0
    %1355 = vmatprep.subr.mxu0 0.0
    %1356 = vmatpush1.msra.mxu0 0.0
    %1357 = vmatprep.subr.mxu0 0.0
    %1358 = vmatpush1.msra.mxu0 0.0
    %1359 = vmatprep.subr.mxu0 0.0
    %1360 = vmatpush1.msra.mxu0 0.0
    %1361 = vmatprep.subr.mxu0 0.0
    %1362 = vmatpush1.msra.mxu0 0.0
    %1363 = vmatprep.subr.mxu0 0.0
    %1364 = vmatpush1.msra.mxu0 0.0
    %1365 = vmatprep.subr.mxu0 0.0
    %1366 = vmatpush1.msra.mxu0 0.0
    %1367 = vmatprep.subr.mxu0 0.0
    %1368 = vmatpush1.msra.mxu0 0.0
    %1369 = vmatprep.subr.mxu0 0.0
    %1370 = vmatpush1.msra.mxu0 0.0
    %1371 = vmatprep.mubr.f32.mxu0 0.0
    %1372 = vmatmul.mubr.f32.gmra.mrb[0].mxu0 %v1305
    %v1373 = vpop.f32.mrb[0].mxu0
    %v1374 = vadd.f32 0.0, %v1373
    %v1375 = vpop.f32.mrb[0].mxu0
    %1376 = vdwg.mxu0
    %1377 = vrot.lane.b32.xlu0 %v183, 96
    %v1378 = vpop.permute.xlu0 %1377
    %v1381 = vsel %vm813, %v900, 0
    %1383 = vmatprep.subr.mxu0 0.0
    %1384 = vmatpush1.msra.mxu0 %v1378
    %1385 = vmatprep.subr.mxu0 0.0
    %1386 = vmatpush1.msra.mxu0 0.0
    %1387 = vmatprep.subr.mxu0 0.0
    %1388 = vmatpush1.msra.mxu0 0.0
    %1389 = vmatprep.subr.mxu0 0.0
    %1390 = vmatpush1.msra.mxu0 0.0
    %1391 = vmatprep.subr.mxu0 0.0
    %1392 = vmatpush1.msra.mxu0 0.0
    %1393 = vmatprep.subr.mxu0 0.0
    %1394 = vmatpush1.msra.mxu0 0.0
    %1395 = vmatprep.subr.mxu0 0.0
    %1396 = vmatpush1.msra.mxu0 0.0
    %1397 = vmatprep.subr.mxu0 0.0
    %1398 = vmatpush1.msra.mxu0 0.0
    %1399 = vmatprep.subr.mxu0 0.0
    %1400 = vmatpush1.msra.mxu0 0.0
    %1401 = vmatprep.subr.mxu0 0.0
    %1402 = vmatpush1.msra.mxu0 0.0
    %1403 = vmatprep.subr.mxu0 0.0
    %1404 = vmatpush1.msra.mxu0 0.0
    %1405 = vmatprep.subr.mxu0 0.0
    %1406 = vmatpush1.msra.mxu0 0.0
    %1407 = vmatprep.subr.mxu0 0.0
    %1408 = vmatpush1.msra.mxu0 0.0
    %1409 = vmatprep.subr.mxu0 0.0
    %1410 = vmatpush1.msra.mxu0 0.0
    %1411 = vmatprep.subr.mxu0 0.0
    %1412 = vmatpush1.msra.mxu0 0.0
    %1413 = vmatprep.subr.mxu0 0.0
    %1414 = vmatpush1.msra.mxu0 0.0
    %1415 = vmatprep.subr.mxu0 0.0
    %1416 = vmatpush1.msra.mxu0 0.0
    %1417 = vmatprep.subr.mxu0 0.0
    %1418 = vmatpush1.msra.mxu0 0.0
    %1419 = vmatprep.subr.mxu0 0.0
    %1420 = vmatpush1.msra.mxu0 0.0
    %1421 = vmatprep.subr.mxu0 0.0
    %1422 = vmatpush1.msra.mxu0 0.0
    %1423 = vmatprep.subr.mxu0 0.0
    %1424 = vmatpush1.msra.mxu0 0.0
    %1425 = vmatprep.subr.mxu0 0.0
    %1426 = vmatpush1.msra.mxu0 0.0
    %1427 = vmatprep.subr.mxu0 0.0
    %1428 = vmatpush1.msra.mxu0 0.0
    %1429 = vmatprep.subr.mxu0 0.0
    %1430 = vmatpush1.msra.mxu0 0.0
    %1431 = vmatprep.subr.mxu0 0.0
    %1432 = vmatpush1.msra.mxu0 0.0
    %1433 = vmatprep.subr.mxu0 0.0
    %1434 = vmatpush1.msra.mxu0 0.0
    %1435 = vmatprep.subr.mxu0 0.0
    %1436 = vmatpush1.msra.mxu0 0.0
    %1437 = vmatprep.subr.mxu0 0.0
    %1438 = vmatpush1.msra.mxu0 0.0
    %1439 = vmatprep.subr.mxu0 0.0
    %1440 = vmatpush1.msra.mxu0 0.0
    %1441 = vmatprep.subr.mxu0 0.0
    %1442 = vmatpush1.msra.mxu0 0.0
    %1443 = vmatprep.subr.mxu0 0.0
    %1444 = vmatpush1.msra.mxu0 0.0
    %1445 = vmatprep.subr.mxu0 0.0
    %1446 = vmatpush1.msra.mxu0 0.0
    %1447 = vmatprep.mubr.f32.mxu0 0.0
    %1448 = vmatmul.mubr.f32.gmra.mrb[0].mxu0 %v1381
    %v1449 = vpop.f32.mrb[0].mxu0
    %v1450 = vadd.f32 0.0, %v1449
    %v1451 = vpop.f32.mrb[0].mxu0
    %1452 = vdwg.mxu0
    %1453 = vrot.lane.b32.xlu0 %v185, 96
    %v1454 = vpop.permute.xlu0 %1453
    %v1457 = vsel %vm813, %v901, 0
    %1459 = vmatprep.subr.mxu0 0.0
    %1460 = vmatpush1.msra.mxu0 %v1454
    %1461 = vmatprep.subr.mxu0 0.0
    %1462 = vmatpush1.msra.mxu0 0.0
    %1463 = vmatprep.subr.mxu0 0.0
    %1464 = vmatpush1.msra.mxu0 0.0
    %1465 = vmatprep.subr.mxu0 0.0
    %1466 = vmatpush1.msra.mxu0 0.0
    %1467 = vmatprep.subr.mxu0 0.0
    %1468 = vmatpush1.msra.mxu0 0.0
    %1469 = vmatprep.subr.mxu0 0.0
    %1470 = vmatpush1.msra.mxu0 0.0
    %1471 = vmatprep.subr.mxu0 0.0
    %1472 = vmatpush1.msra.mxu0 0.0
    %1473 = vmatprep.subr.mxu0 0.0
    %1474 = vmatpush1.msra.mxu0 0.0
    %1475 = vmatprep.subr.mxu0 0.0
    %1476 = vmatpush1.msra.mxu0 0.0
    %1477 = vmatprep.subr.mxu0 0.0
    %1478 = vmatpush1.msra.mxu0 0.0
    %1479 = vmatprep.subr.mxu0 0.0
    %1480 = vmatpush1.msra.mxu0 0.0
    %1481 = vmatprep.subr.mxu0 0.0
    %1482 = vmatpush1.msra.mxu0 0.0
    %1483 = vmatprep.subr.mxu0 0.0
    %1484 = vmatpush1.msra.mxu0 0.0
    %1485 = vmatprep.subr.mxu0 0.0
    %1486 = vmatpush1.msra.mxu0 0.0
    %1487 = vmatprep.subr.mxu0 0.0
    %1488 = vmatpush1.msra.mxu0 0.0
    %1489 = vmatprep.subr.mxu0 0.0
    %1490 = vmatpush1.msra.mxu0 0.0
    %1491 = vmatprep.subr.mxu0 0.0
    %1492 = vmatpush1.msra.mxu0 0.0
    %1493 = vmatprep.subr.mxu0 0.0
    %1494 = vmatpush1.msra.mxu0 0.0
    %1495 = vmatprep.subr.mxu0 0.0
    %1496 = vmatpush1.msra.mxu0 0.0
    %1497 = vmatprep.subr.mxu0 0.0
    %1498 = vmatpush1.msra.mxu0 0.0
    %1499 = vmatprep.subr.mxu0 0.0
    %1500 = vmatpush1.msra.mxu0 0.0
    %1501 = vmatprep.subr.mxu0 0.0
    %1502 = vmatpush1.msra.mxu0 0.0
    %1503 = vmatprep.subr.mxu0 0.0
    %1504 = vmatpush1.msra.mxu0 0.0
    %1505 = vmatprep.subr.mxu0 0.0
    %1506 = vmatpush1.msra.mxu0 0.0
    %1507 = vmatprep.subr.mxu0 0.0
    %1508 = vmatpush1.msra.mxu0 0.0
    %1509 = vmatprep.subr.mxu0 0.0
    %1510 = vmatpush1.msra.mxu0 0.0
    %1511 = vmatprep.subr.mxu0 0.0
    %1512 = vmatpush1.msra.mxu0 0.0
    %1513 = vmatprep.subr.mxu0 0.0
    %1514 = vmatpush1.msra.mxu0 0.0
    %1515 = vmatprep.subr.mxu0 0.0
    %1516 = vmatpush1.msra.mxu0 0.0
    %1517 = vmatprep.subr.mxu0 0.0
    %1518 = vmatpush1.msra.mxu0 0.0
    %1519 = vmatprep.subr.mxu0 0.0
    %1520 = vmatpush1.msra.mxu0 0.0
    %1521 = vmatprep.subr.mxu0 0.0
    %1522 = vmatpush1.msra.mxu0 0.0
    %1523 = vmatprep.mubr.f32.mxu0 0.0
    %1524 = vmatmul.mubr.f32.gmra.mrb[0].mxu0 %v1457
    %v1525 = vpop.f32.mrb[0].mxu0
    %v1526 = vadd.f32 0.0, %v1525
    %v1527 = vpop.f32.mrb[0].mxu0
    %1528 = vdwg.mxu0
    %1531 = vrot.lane.b32.xlu0 %v1146, 4
    %v1532 = vpop.permute.xlu0 %1531
    %1533 = vrot.lane.b32.xlu0 %v1222, 4
    %v1534 = vpop.permute.xlu0 %1533
    %1539 = vrot.lane.b32.xlu0 %v1298, 8
    %v1540 = vpop.permute.xlu0 %1539
    %1541 = vrot.lane.b32.xlu0 %v1374, 8
    %v1542 = vpop.permute.xlu0 %1541
    %1547 = vrot.lane.b32.xlu0 %v1450, 12
    %v1548 = vpop.permute.xlu0 %1547
    %1549 = vrot.lane.b32.xlu0 %v1526, 12
    %v1550 = vpop.permute.xlu0 %1549
    %v1553 = vsel %vm188, %v994, %v1532
    %v1554 = vsel %vm188, %v1070, %v1534
    %v1555 = vsel %vm813, %v1553, %v1540
    %v1556 = vsel %vm813, %v1554, %v1542
    %vm1557 = vcmask 97280
    %v1558 = vsel %vm1557, %v1555, %v1548
    %v1559 = vsel %vm1557, %v1556, %v1550
    %v1560 = vld [vmem:[#allocation2] sm:$0xff]
    %v1561 = vld [vmem:[#allocation2 + $0x8] sm:$0xff]
    %v1563 = vsel %vm90, %v1558, 0
    %v1566 = vsel %vm90, %v1559, 0
    %1568 = vmatprep.subr.mxu0 0.0
    %1569 = vmatpush1.msra.mxu0 %v1560
    %1570 = vmatprep.subr.mxu0 0.0
    %1571 = vmatpush1.msra.mxu0 %v1561
    %1572 = vmatprep.subr.mxu0 0.0
    %1573 = vmatpush1.msra.mxu0 0.0
    %1574 = vmatprep.subr.mxu0 0.0
    %1575 = vmatpush1.msra.mxu0 0.0
    %1576 = vmatprep.subr.mxu0 0.0
    %1577 = vmatpush1.msra.mxu0 0.0
    %1578 = vmatprep.subr.mxu0 0.0
    %1579 = vmatpush1.msra.mxu0 0.0
    %1580 = vmatprep.subr.mxu0 0.0
    %1581 = vmatpush1.msra.mxu0 0.0
    %1582 = vmatprep.subr.mxu0 0.0
    %1583 = vmatpush1.msra.mxu0 0.0
    %1584 = vmatprep.subr.mxu0 0.0
    %1585 = vmatpush1.msra.mxu0 0.0
    %1586 = vmatprep.subr.mxu0 0.0
    %1587 = vmatpush1.msra.mxu0 0.0
    %1588 = vmatprep.subr.mxu0 0.0
    %1589 = vmatpush1.msra.mxu0 0.0
    %1590 = vmatprep.subr.mxu0 0.0
    %1591 = vmatpush1.msra.mxu0 0.0
    %1592 = vmatprep.subr.mxu0 0.0
    %1593 = vmatpush1.msra.mxu0 0.0
    %1594 = vmatprep.subr.mxu0 0.0
    %1595 = vmatpush1.msra.mxu0 0.0
    %1596 = vmatprep.subr.mxu0 0.0
    %1597 = vmatpush1.msra.mxu0 0.0
    %1598 = vmatprep.subr.mxu0 0.0
    %1599 = vmatpush1.msra.mxu0 0.0
    %1600 = vmatprep.subr.mxu0 0.0
    %1601 = vmatpush1.msra.mxu0 0.0
    %1602 = vmatprep.subr.mxu0 0.0
    %1603 = vmatpush1.msra.mxu0 0.0
    %1604 = vmatprep.subr.mxu0 0.0
    %1605 = vmatpush1.msra.mxu0 0.0
    %1606 = vmatprep.subr.mxu0 0.0
    %1607 = vmatpush1.msra.mxu0 0.0
    %1608 = vmatprep.subr.mxu0 0.0
    %1609 = vmatpush1.msra.mxu0 0.0
    %1610 = vmatprep.subr.mxu0 0.0
    %1611 = vmatpush1.msra.mxu0 0.0
    %1612 = vmatprep.subr.mxu0 0.0
    %1613 = vmatpush1.msra.mxu0 0.0
    %1614 = vmatprep.subr.mxu0 0.0
    %1615 = vmatpush1.msra.mxu0 0.0
    %1616 = vmatprep.subr.mxu0 0.0
    %1617 = vmatpush1.msra.mxu0 0.0
    %1618 = vmatprep.subr.mxu0 0.0
    %1619 = vmatpush1.msra.mxu0 0.0
    %1620 = vmatprep.subr.mxu0 0.0
    %1621 = vmatpush1.msra.mxu0 0.0
    %1622 = vmatprep.subr.mxu0 0.0
    %1623 = vmatpush1.msra.mxu0 0.0
    %1624 = vmatprep.subr.mxu0 0.0
    %1625 = vmatpush1.msra.mxu0 0.0
    %1626 = vmatprep.subr.mxu0 0.0
    %1627 = vmatpush1.msra.mxu0 0.0
    %1628 = vmatprep.subr.mxu0 0.0
    %1629 = vmatpush1.msra.mxu0 0.0
    %1630 = vmatprep.subr.mxu0 0.0
    %1631 = vmatpush1.msra.mxu0 0.0
    %1632 = vmatprep.mubr.f32.mxu0 0.0
    %1633 = vmatmul.mubr.f32.gmra.mrb[0].mxu0 %v1563
    %v1634 = vpop.f32.mrb[0].mxu0
    %v1635 = vadd.f32 0.0, %v1634
    %v1636 = vpop.f32.mrb[0].mxu0
    %1637 = vmatprep.mubr.f32.mxu0 0.0
    %1638 = vmatmul.mubr.f32.gmra.mrb[0].mxu0 %v1566
    %v1639 = vpop.f32.mrb[0].mxu0
    %v1640 = vadd.f32 0.0, %v1639
    %v1641 = vpop.f32.mrb[0].mxu0
    %1642 = vdwg.mxu0
    %v1643 = vadd.f32 %v79, %v1635
    %v1644 = vadd.f32 %v80, %v1640
    %v1645 = vld [vmem:[%s5] sm:$0x1]
    %v1647 = vlaneseq
    %v1648 = vshrl.u32 %v1647, 7
    %v1649 = vsub.s32 0, %v1648
    %v1650 = vrot.slane %v1645, %v1649
    %v1652 = vadd.f32 %v1643, %v1650
    %v1653 = vadd.f32 %v1644, %v1650
    %v1654 = vsel %vm90, %v1652, 0.0
    %1655 = vadd.xlane.f32.xlu0 %v1654
    %v1656 = vpop.xlane.xlu0 %1655
    %v1657 = vsel %vm90, %v1653, 0.0
    %1658 = vadd.xlane.f32.xlu0 %v1657
    %v1659 = vpop.xlane.xlu0 %1658
    %v1660 = vrcp.pop 16.0
    %v1661 = vmul.f32 %v1656, %v1660
    %v1662 = vmul.f32 %v1659, %v1660
    %v1663 = vsub.f32 %v1652, %v1661
    %v1664 = vsub.f32 %v1653, %v1662
    %v1665 = vmul.f32 %v1663, %v1663
    %v1666 = vmul.f32 %v1664, %v1664
    %v1667 = vsel %vm90, %v1665, 0.0
    %1668 = vadd.xlane.f32.xlu0 %v1667
    %v1669 = vpop.xlane.xlu0 %1668
    %v1670 = vsel %vm90, %v1666, 0.0
    %1671 = vadd.xlane.f32.xlu0 %v1670
    %v1672 = vpop.xlane.xlu0 %1671
    %v1673 = vmul.f32 %v1669, %v1660
    %v1674 = vmul.f32 %v1672, %v1660
    %v1675 = vadd.f32 %v1673, 1e-05
    %v1676 = vadd.f32 %v1674, 1e-05
    %v1677 = vrsqrt.pop %v1675
    %v1678 = vrsqrt.pop %v1676
    %v1679 = vmul.f32 %v1663, %v1677
    %v1680 = vmul.f32 %v1664, %v1678
    %v1681 = vld [vmem:[%s6] sm:$0x1]
    %v1683 = vlaneseq
    %v1684 = vshrl.u32 %v1683, 7
    %v1685 = vsub.s32 0, %v1684
    %v1686 = vrot.slane %v1681, %v1685
    %v1688 = vmul.f32 %v1679, %v1686
    %v1689 = vmul.f32 %v1680, %v1686
    %v1690 = vld [vmem:[%s7] sm:$0x1]
    %v1692 = vlaneseq
    %v1693 = vshrl.u32 %v1692, 7
    %v1694 = vsub.s32 0, %v1693
    %v1695 = vrot.slane %v1690, %v1694
    %v1697 = vadd.f32 %v1688, %v1695
    %v1698 = vadd.f32 %v1689, %v1695
    %v1699 = vld [vmem:[#allocation5] sm:$0xff]
    %v1700 = vld [vmem:[#allocation5 + $0x8] sm:$0xff]
    %v1701 = vld [vmem:[%s9] sm:$0x1]
    %v1703 = vlaneseq
    %v1704 = vshrl.u32 %v1703, 7
    %v1705 = vsub.s32 0, %v1704
    %v1706 = vrot.slane %v1701, %v1705
    %v1709 = vsel %vm90, %v1697, 0
    %v1712 = vsel %vm90, %v1698, 0
    %1714 = vmatprep.subr.mxu0 0.0
    %1715 = vmatpush1.msra.mxu0 %v1699
    %1716 = vmatprep.subr.mxu0 0.0
    %1717 = vmatpush1.msra.mxu0 %v1700
    %1718 = vmatprep.subr.mxu0 0.0
    %1719 = vmatpush1.msra.mxu0 0.0
    %1720 = vmatprep.subr.mxu0 0.0
    %1721 = vmatpush1.msra.mxu0 0.0
    %1722 = vmatprep.subr.mxu0 0.0
    %1723 = vmatpush1.msra.mxu0 0.0
    %1724 = vmatprep.subr.mxu0 0.0
    %1725 = vmatpush1.msra.mxu0 0.0
    %1726 = vmatprep.subr.mxu0 0.0
    %1727 = vmatpush1.msra.mxu0 0.0
    %1728 = vmatprep.subr.mxu0 0.0
    %1729 = vmatpush1.msra.mxu0 0.0
    %1730 = vmatprep.subr.mxu0 0.0
    %1731 = vmatpush1.msra.mxu0 0.0
    %1732 = vmatprep.subr.mxu0 0.0
    %1733 = vmatpush1.msra.mxu0 0.0
    %1734 = vmatprep.subr.mxu0 0.0
    %1735 = vmatpush1.msra.mxu0 0.0
    %1736 = vmatprep.subr.mxu0 0.0
    %1737 = vmatpush1.msra.mxu0 0.0
    %1738 = vmatprep.subr.mxu0 0.0
    %1739 = vmatpush1.msra.mxu0 0.0
    %1740 = vmatprep.subr.mxu0 0.0
    %1741 = vmatpush1.msra.mxu0 0.0
    %1742 = vmatprep.subr.mxu0 0.0
    %1743 = vmatpush1.msra.mxu0 0.0
    %1744 = vmatprep.subr.mxu0 0.0
    %1745 = vmatpush1.msra.mxu0 0.0
    %1746 = vmatprep.subr.mxu0 0.0
    %1747 = vmatpush1.msra.mxu0 0.0
    %1748 = vmatprep.subr.mxu0 0.0
    %1749 = vmatpush1.msra.mxu0 0.0
    %1750 = vmatprep.subr.mxu0 0.0
    %1751 = vmatpush1.msra.mxu0 0.0
    %1752 = vmatprep.subr.mxu0 0.0
    %1753 = vmatpush1.msra.mxu0 0.0
    %1754 = vmatprep.subr.mxu0 0.0
    %1755 = vmatpush1.msra.mxu0 0.0
    %1756 = vmatprep.subr.mxu0 0.0
    %1757 = vmatpush1.msra.mxu0 0.0
    %1758 = vmatprep.subr.mxu0 0.0
    %1759 = vmatpush1.msra.mxu0 0.0
    %1760 = vmatprep.subr.mxu0 0.0
    %1761 = vmatpush1.msra.mxu0 0.0
    %1762 = vmatprep.subr.mxu0 0.0
    %1763 = vmatpush1.msra.mxu0 0.0
    %1764 = vmatprep.subr.mxu0 0.0
    %1765 = vmatpush1.msra.mxu0 0.0
    %1766 = vmatprep.subr.mxu0 0.0
    %1767 = vmatpush1.msra.mxu0 0.0
    %1768 = vmatprep.subr.mxu0 0.0
    %1769 = vmatpush1.msra.mxu0 0.0
    %1770 = vmatprep.subr.mxu0 0.0
    %1771 = vmatpush1.msra.mxu0 0.0
    %1772 = vmatprep.subr.mxu0 0.0
    %1773 = vmatpush1.msra.mxu0 0.0
    %1774 = vmatprep.subr.mxu0 0.0
    %1775 = vmatpush1.msra.mxu0 0.0
    %1776 = vmatprep.subr.mxu0 0.0
    %1777 = vmatpush1.msra.mxu0 0.0
    %1778 = vmatprep.mubr.f32.mxu0 0.0
    %1779 = vmatmul.mubr.f32.gmra.mrb[0].mxu0 %v1709
    %v1780 = vpop.f32.mrb[0].mxu0
    %v1781 = vadd.f32 %v1706, %v1780
    %v1782 = vpop.f32.mrb[0].mxu0
    %1783 = vmatprep.mubr.f32.mxu0 0.0
    %1784 = vmatmul.mubr.f32.gmra.mrb[0].mxu0 %v1712
    %v1785 = vpop.f32.mrb[0].mxu0
    %v1786 = vadd.f32 %v1706, %v1785
    %v1787 = vpop.f32.mrb[0].mxu0
    %1788 = vdwg.mxu0
    %v1789 = vmax.f32 %v1781, 0.0
    %v1790 = vmax.f32 %v1786, 0.0
    %v1791 = vld [vmem:[%s10] sm:$0xff]
    %v1792 = vld [vmem:[%s10 + $0x8] sm:$0xff]
    %v1793 = vld [vmem:[%s10 + $0x10] sm:$0xff]
    %v1794 = vld [vmem:[%s10 + $0x18] sm:$0xff]
    %vm1795 = vcmask 261120
    %v1797 = vsel %vm1795, %v1789, 0
    %v1800 = vsel %vm1795, %v1790, 0
    %1802 = vmatprep.subr.mxu0 0.0
    %1803 = vmatpush1.msra.mxu0 %v1791
    %1804 = vmatprep.subr.mxu0 0.0
    %1805 = vmatpush1.msra.mxu0 %v1792
    %1806 = vmatprep.subr.mxu0 0.0
    %1807 = vmatpush1.msra.mxu0 %v1793
    %1808 = vmatprep.subr.mxu0 0.0
    %1809 = vmatpush1.msra.mxu0 %v1794
    %1810 = vmatprep.subr.mxu0 0.0
    %1811 = vmatpush1.msra.mxu0 0.0
    %1812 = vmatprep.subr.mxu0 0.0
    %1813 = vmatpush1.msra.mxu0 0.0
    %1814 = vmatprep.subr.mxu0 0.0
    %1815 = vmatpush1.msra.mxu0 0.0
    %1816 = vmatprep.subr.mxu0 0.0
    %1817 = vmatpush1.msra.mxu0 0.0
    %1818 = vmatprep.subr.mxu0 0.0
    %1819 = vmatpush1.msra.mxu0 0.0
    %1820 = vmatprep.subr.mxu0 0.0
    %1821 = vmatpush1.msra.mxu0 0.0
    %1822 = vmatprep.subr.mxu0 0.0
    %1823 = vmatpush1.msra.mxu0 0.0
    %1824 = vmatprep.subr.mxu0 0.0
    %1825 = vmatpush1.msra.mxu0 0.0
    %1826 = vmatprep.subr.mxu0 0.0
    %1827 = vmatpush1.msra.mxu0 0.0
    %1828 = vmatprep.subr.mxu0 0.0
    %1829 = vmatpush1.msra.mxu0 0.0
    %1830 = vmatprep.subr.mxu0 0.0
    %1831 = vmatpush1.msra.mxu0 0.0
    %1832 = vmatprep.subr.mxu0 0.0
    %1833 = vmatpush1.msra.mxu0 0.0
    %1834 = vmatprep.subr.mxu0 0.0
    %1835 = vmatpush1.msra.mxu0 0.0
    %1836 = vmatprep.subr.mxu0 0.0
    %1837 = vmatpush1.msra.mxu0 0.0
    %1838 = vmatprep.subr.mxu0 0.0
    %1839 = vmatpush1.msra.mxu0 0.0
    %1840 = vmatprep.subr.mxu0 0.0
    %1841 = vmatpush1.msra.mxu0 0.0
    %1842 = vmatprep.subr.mxu0 0.0
    %1843 = vmatpush1.msra.mxu0 0.0
    %1844 = vmatprep.subr.mxu0 0.0
    %1845 = vmatpush1.msra.mxu0 0.0
    %1846 = vmatprep.subr.mxu0 0.0
    %1847 = vmatpush1.msra.mxu0 0.0
    %1848 = vmatprep.subr.mxu0 0.0
    %1849 = vmatpush1.msra.mxu0 0.0
    %1850 = vmatprep.subr.mxu0 0.0
    %1851 = vmatpush1.msra.mxu0 0.0
    %1852 = vmatprep.subr.mxu0 0.0
    %1853 = vmatpush1.msra.mxu0 0.0
    %1854 = vmatprep.subr.mxu0 0.0
    %1855 = vmatpush1.msra.mxu0 0.0
    %1856 = vmatprep.subr.mxu0 0.0
    %1857 = vmatpush1.msra.mxu0 0.0
    %1858 = vmatprep.subr.mxu0 0.0
    %1859 = vmatpush1.msra.mxu0 0.0
    %1860 = vmatprep.subr.mxu0 0.0
    %1861 = vmatpush1.msra.mxu0 0.0
    %1862 = vmatprep.subr.mxu0 0.0
    %1863 = vmatpush1.msra.mxu0 0.0
    %1864 = vmatprep.subr.mxu0 0.0
    %1865 = vmatpush1.msra.mxu0 0.0
    %1866 = vmatprep.mubr.f32.mxu0 0.0
    %1867 = vmatmul.mubr.f32.gmra.mrb[0].mxu0 %v1797
    %v1868 = vpop.f32.mrb[0].mxu0
    %v1869 = vadd.f32 0.0, %v1868
    %v1870 = vpop.f32.mrb[0].mxu0
    %1871 = vmatprep.mubr.f32.mxu0 0.0
    %1872 = vmatmul.mubr.f32.gmra.mrb[0].mxu0 %v1800
    %v1873 = vpop.f32.mrb[0].mxu0
    %v1874 = vadd.f32 0.0, %v1873
    %v1875 = vpop.f32.mrb[0].mxu0
    %1876 = vdwg.mxu0
    %v1877 = vadd.f32 %v1697, %v1869
    %v1878 = vadd.f32 %v1698, %v1874
    %v1879 = vld [vmem:[%s11] sm:$0x1]
    %v1881 = vlaneseq
    %v1882 = vshrl.u32 %v1881, 7
    %v1883 = vsub.s32 0, %v1882
    %v1884 = vrot.slane %v1879, %v1883
    %v1886 = vadd.f32 %v1877, %v1884
    %v1887 = vadd.f32 %v1878, %v1884
    %v1888 = vsel %vm90, %v1886, 0.0
    %1889 = vadd.xlane.f32.xlu0 %v1888
    %v1890 = vpop.xlane.xlu0 %1889
    %v1891 = vsel %vm90, %v1887, 0.0
    %1892 = vadd.xlane.f32.xlu0 %v1891
    %v1893 = vpop.xlane.xlu0 %1892
    %v1894 = vmul.f32 %v1890, %v1660
    %v1895 = vmul.f32 %v1893, %v1660
    %v1896 = vsub.f32 %v1886, %v1894
    %v1897 = vsub.f32 %v1887, %v1895
    %v1898 = vmul.f32 %v1896, %v1896
    %v1899 = vmul.f32 %v1897, %v1897
    %v1900 = vsel %vm90, %v1898, 0.0
    %1901 = vadd.xlane.f32.xlu0 %v1900
    %v1902 = vpop.xlane.xlu0 %1901
    %v1903 = vsel %vm90, %v1899, 0.0
    %1904 = vadd.xlane.f32.xlu0 %v1903
    %v1905 = vpop.xlane.xlu0 %1904
    %v1906 = vmul.f32 %v1902, %v1660
    %v1907 = vmul.f32 %v1905, %v1660
    %v1908 = vadd.f32 %v1906, 1e-05
    %v1909 = vadd.f32 %v1907, 1e-05
    %v1910 = vrsqrt.pop %v1908
    %v1911 = vrsqrt.pop %v1909
    %v1912 = vmul.f32 %v1896, %v1910
    %v1913 = vmul.f32 %v1897, %v1911
    %v1914 = vld [vmem:[%s12] sm:$0x1]
    %v1916 = vlaneseq
    %v1917 = vshrl.u32 %v1916, 7
    %v1918 = vsub.s32 0, %v1917
    %v1919 = vrot.slane %v1914, %v1918
    %v1921 = vmul.f32 %v1912, %v1919
    %v1922 = vmul.f32 %v1913, %v1919
    %v1923 = vld [vmem:[%s13] sm:$0x1]
    %v1925 = vlaneseq
    %v1926 = vshrl.u32 %v1925, 7
    %v1927 = vsub.s32 0, %v1926
    %v1928 = vrot.slane %v1923, %v1927
    %v1930 = vadd.f32 %v1921, %v1928
    %v1931 = vadd.f32 %v1922, %v1928
    %1932 = vst.msk [vmem:[#allocation7] sm:$0xff] %vm90, %v1930
    %1933 = vst.msk [vmem:[#allocation7 + $0x8] sm:$0xff] %vm90, %v1931
    // Predicated region
    $region66: #{tpu_custom_call.1} parent=1 // pred_check
      _
    $region67: #{tpu_custom_call.1} parent=1 // pred_check_branch
      %1935 = sbr.rel (0) target = $region69
    $region68: #{tpu_custom_call.1} parent=1 // pred_region
      %s1937 = ssub.s32 256, 256
      %1938 = vsyncadd [#allocation4], %s1937
      %s1939 = sshll.u32 [#allocation7], 4
      %s1940 = int_to_ptr.vmem [resolvable:$true] %s1939
      %1945 = dma.vmem_to_hbm [thread:$0]  %s1940, 256, %s14, [#allocation4], 128, 128, 8
    $region69: #{tpu_custom_call.1} parent=1 // pred_fallthru
      _
    // Predicated region
    $region70: #{tpu_custom_call.1} parent=1 // pred_check
      _
    $region71: #{tpu_custom_call.1} parent=1 // pred_check_branch
      %1947 = sbr.rel (0) target = $region73
    $region72: #{tpu_custom_call.1} parent=1 // pred_region
      %s1949 = ssub.s32 256, 256
      %1950 = vsyncadd [#allocation9], %s1949
      %s1951 = sshll.u32 [#allocation8], 4
      %s1952 = int_to_ptr.vmem [resolvable:$true] %s1951
      %1957 = dma.vmem_to_hbm [thread:$0]  %s1952, 256, %s15, [#allocation9], 128, 128, 8
    $region73: #{tpu_custom_call.1} parent=1 // pred_fallthru
      _
    // Predicated region
    $region74: #{tpu_custom_call.1} parent=1 // pred_check
      _
    $region75: #{tpu_custom_call.1} parent=1 // pred_check_branch
      %1959 = sbr.rel (0) target = $region77
    $region76: #{tpu_custom_call.1} parent=1 // pred_region
      %1960 = dma.done [#allocation4], 256
    $region77: #{tpu_custom_call.1} parent=1 // pred_fallthru
      _
    // Predicated region
    $region78: #{tpu_custom_call.1} parent=1 // pred_check
      _
    $region79: #{tpu_custom_call.1} parent=1 // pred_check_branch
      %1962 = sbr.rel (0) target = $region81
    $region80: #{tpu_custom_call.1} parent=1 // pred_region
      %1963 = dma.done [#allocation9], 256
    $region81: #{tpu_custom_call.1} parent=1 // pred_fallthru
      _
    %1964 = vsyncpa [#allocation3], 1
    %1965 = vsyncpa [#allocation6], 1
    %1966 = vsyncpa [#allocation4], 1
    %1967 = vsyncpa [#allocation9], 1

</llo_original>
